<compile_context>
chip_gen: v7x
topology: tpu7x:2x2x1
jax: 0.10.0
libtpu: 0.0.40
codegen_flags: <defaults>
</compile_context>

<pallas_src>
import functools
import math

import jax
import jax.numpy as jnp
from jax import lax
from jax.experimental import pallas as pl
from jax.experimental.pallas import tpu as pltpu


# ----------------------------- shared math helpers -----------------------------
def _recip(x):
    """1/x via EUP approx reciprocal + one Newton step (~f32 exact)."""
    r = pl.reciprocal(x, approx=True)
    return r * (2.0 - x * r)


def _erf(x):
    # Abramowitz-Stegun 7.1.26 polynomial erf approximation (|err| < 1.5e-7).
    a1, a2, a3, a4, a5 = 0.254829592, -0.284496736, 1.421413741, -1.453152027, 1.061405429
    pc = 0.3275911
    ax = jnp.abs(x)
    t = _recip(1.0 + pc * ax)
    poly = ((((a5 * t + a4) * t + a3) * t + a2) * t + a1) * t
    y = 1.0 - poly * jnp.exp(-ax * ax)
    return jnp.where(x >= 0, y, -y)


def _gelu(x, *, approximate=False):
    if approximate:
        # tanh GELU — cheaper on the VPU; slight divergence from nn.GELU() default.
        c = math.sqrt(2.0 / math.pi)
        return 0.5 * x * (1.0 + jnp.tanh(c * (x + 0.044715 * x * x * x)))
    # Exact (erf-based) GELU, matching PyTorch nn.GELU() default.
    return 0.5 * x * (1.0 + _erf(x * (1.0 / math.sqrt(2.0))))


def _layer_norm(x, g, b, eps):
    mu = jnp.mean(x, axis=-1, keepdims=True)
    xc = x - mu
    var = jnp.mean(xc * xc, axis=-1, keepdims=True)
    return xc * lax.rsqrt(var + eps) * g + b


def _round_up(x, m):
    return (x + m - 1) // m * m


# ----------------------------- Pallas kernels -----------------------------
def encoder_stack_kernel(x_ref, wqkv_ref, bqkv_ref, wo_ref, bo_ref,
                         ln1g_ref, ln1b_ref, w1_ref, b1_ref, w2_ref, b2_ref,
                         ln2g_ref, ln2b_ref, o_ref,
                         *, nhead, alpha, eps, gelu_approximate):
    """All encoder layers for one batch tile.

    Grid = (batch_tiles, num_layers).  The OUTPUT block's index map is constant across
    the layer axis, so it is VMEM-resident and serves as the layer-to-layer carry
    (in the matmul dtype); weight refs carry a leading size-1 layer dim selected by
    the index_map, so the next layer's weights prefetch via the pipeline.
    """
    layer = pl.program_id(1)
    Bb, S, E = x_ref.shape
    R = Bb * S
    dh = E // nhead
    scale = 1.0 / math.sqrt(dh)
    md = o_ref.dtype                                  # matmul / carry dtype

    @pl.when(layer == 0)
    def _():
        o_ref[...] = x_ref[...]                       # initialize the resident carry

    x_md = o_ref[...].reshape(R, E)                   # carry in matmul dtype
    x = x_md.astype(jnp.float32)                      # f32 for residual / layernorm math

    # --- fused QKV projection: one (R,E)@(E,3E) MXU matmul ---
    # (the 1/beta scaling of q,k inputs is folded into Wq/Wk on the host)
    qkv = jnp.dot(x_md, wqkv_ref[0],
                  preferred_element_type=jnp.float32) + bqkv_ref[0]     # (R, 3E) f32
    q = qkv[:, 0:E].reshape(Bb, S, E).astype(md)
    k = qkv[:, E:2 * E].reshape(Bb, S, E).astype(md)
    v = qkv[:, 2 * E:3 * E].reshape(Bb, S, E).astype(md)

    # --- attention core: static loop over heads, batched over the batch dim ---
    # TODO(synk): replace with a head-batched einsum 'bqhd,bkhd->bhqk' once multi-batch
    # dot_general lowering is guaranteed; slices/concat are 128-aligned when dh >= 128.
    heads = []
    for h in range(nhead):
        qh = q[:, :, h * dh:(h + 1) * dh]             # (Bb, S, dh)
        kh = k[:, :, h * dh:(h + 1) * dh]
        vh = v[:, :, h * dh:(h + 1) * dh]
        s = jnp.einsum("bqd,bkd->bqk", qh, kh,
                       preferred_element_type=jnp.float32) * scale      # (Bb, S, S)
        s = s - jnp.max(s, axis=-1, keepdims=True)
        p = jnp.exp(s)
        p = p * _recip(jnp.sum(p, axis=-1, keepdims=True))
        heads.append(jnp.einsum("bqk,bkd->bqd", p.astype(md), vh,
                                preferred_element_type=jnp.float32))    # (Bb, S, dh)
    o_cat = jnp.concatenate(heads, axis=-1).reshape(R, E)               # f32

    # --- output projection: single (R,E)@(E,E) matmul on concatenated heads ---
    attn = jnp.dot(o_cat.astype(md), wo_ref[0],
                   preferred_element_type=jnp.float32) + bo_ref[0]

    # --- residual + norm1 (post-norm path; dropout = identity) ---
    y1 = _layer_norm(alpha * x + attn, ln1g_ref[0], ln1b_ref[0], eps)

    # --- feed-forward block + residual + norm2 ---
    # TODO(synk): F-chunked weight streaming for large E*F on v7x (64 MiB VMEM).
    hmid = _gelu(jnp.dot(y1.astype(md), w1_ref[0],
                         preferred_element_type=jnp.float32) + b1_ref[0],
                 approximate=gelu_approximate)
    ff = jnp.dot(hmid.astype(md), w2_ref[0],
                 preferred_element_type=jnp.float32) + b2_ref[0]
    y2 = _layer_norm(alpha * y1 + ff, ln2g_ref[0], ln2b_ref[0], eps)

    # carry to the next layer (resident in VMEM; written back to HBM once per batch tile)
    o_ref[...] = y2.astype(md).reshape(Bb, S, E)


def lm_head_kernel(x_ref, w_ref, b_ref, o_ref):
    """LM head tile: logits[i, j] = x[i] @ W[:, j] + b[j] (x/W already in matmul dtype)."""
    o_ref[...] = jnp.dot(x_ref[...], w_ref[...],
                         preferred_element_type=jnp.float32) + b_ref[...]


# ----------------------------- budgeting helpers -----------------------------
def _chip_budget(B, S):
    """Generation-aware VMEM limit + default batch_tiles.

    64-MiB-VMEM parts (v7x): tighter scoped limit, shard the parallel batch axis across
    the two TensorCores when enough rows remain per core.  128-MiB parts (v5e/v6e):
    single batch tile so the stacked weights stream from HBM only once.
    """
    try:
        cap = int(pltpu.get_tpu_info().vmem_capacity_bytes)
    except Exception:
        cap = 128 * 1024 * 1024
    if cap <= 96 * 1024 * 1024:                       # v7x-class (64 MiB / TensorCore)
        vmem_limit = 38 * 1024 * 1024
        bt = 2 if (B % 2 == 0 and (B // 2) * S >= 512) else 1
    else:                                             # v5e / v6e (128 MiB)
        vmem_limit = 64 * 1024 * 1024
        bt = 1
    return vmem_limit, bt


def _choose_lm_tiles(Rp, Vp, E, x_bytes, w_bytes, vmem_limit_bytes):
    """Largest lane-dense (tm, tn) that fits a conservative VMEM budget."""
    budget = int(0.6 * vmem_limit_bytes)
    for tn in (2048, 1024, 512, 256, 128):
        if Vp % tn:
            continue
        for tm in (512, 256, 128):
            if Rp % tm:
                continue
            need = (2 * tm * E * x_bytes            # x block, double-buffered
                    + 2 * E * tn * w_bytes          # weight block, double-buffered
                    + 2 * tm * tn * 4               # f32 output block
                    + 2 * tn * 4)                   # bias block
            if need <= budget:
                return tm, tn
    return 128, 128


# ----------------------------- wrappers -----------------------------
def stack_layer_params(layers, *, beta):
    """Stack per-layer params along a leading layer axis; fuse QKV and fold 1/beta."""
    def st(name):
        return jnp.stack([lp[name] for lp in layers], axis=0)

    wqkv = jnp.concatenate([st("wq") / beta, st("wk") / beta, st("wv")], axis=2)
    bqkv = jnp.concatenate([st("bq"), st("bk"), st("bv")], axis=1)[:, None, :]
    return dict(
        wqkv=wqkv, bqkv=bqkv,
        wo=st("wo"), bo=st("bo")[:, None, :],
        ln1g=st("ln1g")[:, None, :], ln1b=st("ln1b")[:, None, :],
        w1=st("w1"), b1=st("b1")[:, None, :],
        w2=st("w2"), b2=st("b2")[:, None, :],
        ln2g=st("ln2g")[:, None, :], ln2b=st("ln2b")[:, None, :],
    )


def prepare_encoder_lm_params(params, *, nhead, beta, matmul_dtype=jnp.bfloat16):
    """One-time weight preparation: stack layers, cast matmul weights to the matmul dtype,
    pad the LM head to a multiple of 128 vocab columns.  Avoids per-forward-call casts."""
    md = matmul_dtype
    stacked = stack_layer_params(params["layers"], beta=beta)
    mm_names = ("wqkv", "wo", "w1", "w2")
    stacked = {k: (v.astype(md) if k in mm_names else v) for k, v in stacked.items()}

    fc_w = params["fc_w"]
    fc_b = params["fc_b"].reshape(1, -1)
    E, V = fc_w.shape
    Vp = _round_up(V, 128)
    if Vp != V:
        fc_w = jnp.pad(fc_w, ((0, 0), (0, Vp - V)))
        fc_b = jnp.pad(fc_b, ((0, 0), (0, Vp - V)))

    return dict(
        embedding=params["embedding"],
        pos_encoding=params["pos_encoding"],
        stacked=stacked,
        fc_w=fc_w.astype(md),
        fc_b=fc_b.astype(jnp.float32),
        vocab_size=V,
        nhead=nhead,
        matmul_dtype=md,
    )


def encoder_stack_pallas(x, stacked, *, nhead, alpha, eps=1e-5, batch_tiles=1,
                         gelu_approximate=False, vmem_limit_bytes=64 * 1024 * 1024):
    B, S, E = x.shape
    assert E % nhead == 0
    assert B % batch_tiles == 0
    Bb = B // batch_tiles
    num_layers = stacked["wqkv"].shape[0]

    args = (x, stacked["wqkv"], stacked["bqkv"], stacked["wo"], stacked["bo"],
            stacked["ln1g"], stacked["ln1b"], stacked["w1"], stacked["b1"],
            stacked["w2"], stacked["b2"], stacked["ln2g"], stacked["ln2b"])

    in_specs = [pl.BlockSpec((Bb, S, E), lambda bt, l: (bt, 0, 0))]
    in_specs += [pl.BlockSpec((1,) + a.shape[1:], lambda bt, l: (l, 0, 0))
                 for a in args[1:]]

    kernel = functools.partial(encoder_stack_kernel, nhead=nhead, alpha=alpha,
                               eps=eps, gelu_approximate=gelu_approximate)
    return pl.pallas_call(
        kernel,
        out_shape=jax.ShapeDtypeStruct((B, S, E), x.dtype),   # matmul dtype (bf16 in prod)
        grid=(batch_tiles, num_layers),
        in_specs=in_specs,
        out_specs=pl.BlockSpec((Bb, S, E), lambda bt, l: (bt, 0, 0)),
        compiler_params=pltpu.CompilerParams(
            dimension_semantics=("parallel", "arbitrary"),
            vmem_limit_bytes=vmem_limit_bytes),
    )(*args)


def lm_head_pallas(x2, w, b, *, vmem_limit_bytes):
    """Tiled LM head over (row tiles, vocab tiles); x resident across the vocab axis.
    x2 arrives already in the matmul dtype (bf16 in prod), w is pre-cast/pre-padded."""
    R, E = x2.shape
    Vp = w.shape[1]
    Rp = _round_up(R, 128)
    if Rp != R:
        x2 = jnp.pad(x2, ((0, Rp - R), (0, 0)))
    tm, tn = _choose_lm_tiles(Rp, Vp, E, x2.dtype.itemsize, w.dtype.itemsize,
                              vmem_limit_bytes)
    out = pl.pallas_call(
        lm_head_kernel,
        out_shape=jax.ShapeDtypeStruct((Rp, Vp), jnp.float32),
        grid=(Rp // tm, Vp // tn),
        in_specs=[pl.BlockSpec((tm, E), lambda i, j: (i, 0)),
                  pl.BlockSpec((E, tn), lambda i, j: (0, j)),
                  pl.BlockSpec((1, tn), lambda i, j: (0, j))],
        out_specs=pl.BlockSpec((tm, tn), lambda i, j: (i, j)),
        compiler_params=pltpu.CompilerParams(
            dimension_semantics=("parallel", "parallel"),
            vmem_limit_bytes=vmem_limit_bytes),
    )(x2, w, b)
    return out[:R]


def make_positional_encoding(emb_size, max_len=5000, N=10000):
    # Exact reproduction of PositionalEncoding.__init__ (including its div_term formula).
    position = jnp.arange(max_len, dtype=jnp.float32)[:, None]
    div_term = jnp.exp(jnp.arange(0, emb_size, 2, dtype=jnp.float32)
                       * -jnp.log(jnp.float32(N) / emb_size))
    pe = jnp.zeros((max_len, emb_size), dtype=jnp.float32)
    pe = pe.at[:, 0::2].set(jnp.sin(position * div_term))
    pe = pe.at[:, 1::2].set(jnp.cos(position * div_term))
    return pe


def encoder_lm_forward(tokens, prep, *, alpha, batch_tiles=None,
                       gelu_approximate=False, vmem_limit_bytes=None):
    """EncoderLM.forward (masking=False, padding_idx=None, inference)."""
    md = prep["matmul_dtype"]
    nhead = prep["nhead"]
    emb = prep["embedding"]
    E = emb.shape[1]
    B, S = tokens.shape

    x = jnp.take(emb, tokens, axis=0) * jnp.sqrt(jnp.float32(E))
    # PositionalEncoding.forward quirk (intentional, per the PyTorch module): the
    # encoding is indexed by *batch* index (p = pe[:B]) and broadcast over the
    # sequence dimension.  Reproduced exactly — do not "fix".
    x = x + prep["pos_encoding"][:B][:, None, :]
    x = x.astype(md)

    auto_limit, auto_bt = _chip_budget(B, S)
    if vmem_limit_bytes is None:
        vmem_limit_bytes = auto_limit
    if batch_tiles is None:
        batch_tiles = auto_bt if B % auto_bt == 0 else 1

    h = encoder_stack_pallas(x, prep["stacked"], nhead=nhead, alpha=alpha,
                             batch_tiles=batch_tiles, gelu_approximate=gelu_approximate,
                             vmem_limit_bytes=vmem_limit_bytes)          # (B,S,E) in md
    logits = lm_head_pallas(h.reshape(B * S, E), prep["fc_w"], prep["fc_b"],
                            vmem_limit_bytes=vmem_limit_bytes)           # (B*S, Vp) f32
    V = prep["vocab_size"]
    return logits[:, :V].reshape(B, S, V)


# ----------------------------- pure-JAX reference -----------------------------
def encoder_layer_ref(x, p, *, nhead, alpha, beta, eps=1e-5):
    hp = lax.Precision.HIGHEST
    B, S, E = x.shape
    dh = E // nhead
    xs = x / beta
    q = jnp.einsum("bse,ef->bsf", xs, p["wq"], precision=hp) + p["bq"]
    k = jnp.einsum("bse,ef->bsf", xs, p["wk"], precision=hp) + p["bk"]
    v = jnp.einsum("bse,ef->bsf", x, p["wv"], precision=hp) + p["bv"]
    q = q.reshape(B, S, nhead, dh)
    k = k.reshape(B, S, nhead, dh)
    v = v.reshape(B, S, nhead, dh)
    s = jnp.einsum("bqhd,bkhd->bhqk", q, k, precision=hp) / math.sqrt(dh)
    a = jax.nn.softmax(s, axis=-1)
    o = jnp.einsum("bhqk,bkhd->bqhd", a, v, precision=hp).reshape(B, S, E)
    attn = jnp.einsum("bse,ef->bsf", o, p["wo"], precision=hp) + p["bo"]
    y1 = _layer_norm(alpha * x + attn, p["ln1g"], p["ln1b"], eps)
    h = jax.nn.gelu(jnp.einsum("bse,ef->bsf", y1, p["w1"], precision=hp) + p["b1"],
                    approximate=False)
    ff = jnp.einsum("bsf,fe->bse", h, p["w2"], precision=hp) + p["b2"]
    return _layer_norm(alpha * y1 + ff, p["ln2g"], p["ln2b"], eps)


def encoder_lm_ref(tokens, params, *, nhead, alpha, beta):
    hp = lax.Precision.HIGHEST
    E = params["embedding"].shape[1]
    B, _ = tokens.shape
    x = jnp.take(params["embedding"], tokens, axis=0) * jnp.sqrt(jnp.float32(E))
    x = x + params["pos_encoding"][:B][:, None, :]
    for lp in params["layers"]:
        x = encoder_layer_ref(x, lp, nhead=nhead, alpha=alpha, beta=beta)
    return jnp.einsum("bse,ev->bsv", x, params["fc_w"], precision=hp) + params["fc_b"]


# ----------------------------- parameter init -----------------------------
def _xavier(key, shape, fan_in, fan_out, gain=1.0):
    std = gain * math.sqrt(2.0 / (fan_in + fan_out))
    return jax.random.normal(key, shape, jnp.float32) * std


def init_layer(key, E, F, nhead, beta):
    ks = jax.random.split(key, 12)
    return dict(
        wq=_xavier(ks[0], (E, E), E, E, beta),
        wk=_xavier(ks[1], (E, E), E, E, beta),
        wv=_xavier(ks[2], (E, E), E, E, beta),
        wo=_xavier(ks[3], (E, E), E, E, beta),
        bq=jax.random.normal(ks[4], (E,), jnp.float32) * 0.02,
        bk=jax.random.normal(ks[5], (E,), jnp.float32) * 0.02,
        bv=jax.random.normal(ks[6], (E,), jnp.float32) * 0.02,
        bo=jax.random.normal(ks[7], (E,), jnp.float32) * 0.02,
        ln1g=jnp.ones((E,), jnp.float32), ln1b=jnp.zeros((E,), jnp.float32),
        w1=_xavier(ks[8], (E, F), E, F, beta),
        b1=jax.random.normal(ks[9], (F,), jnp.float32) * 0.02,
        w2=_xavier(ks[10], (F, E), F, E, beta),
        b2=jax.random.normal(ks[11], (E,), jnp.float32) * 0.02,
        ln2g=jnp.ones((E,), jnp.float32), ln2b=jnp.zeros((E,), jnp.float32),
    )


# ----------------------------- main -----------------------------
if __name__ == "__main__":
    vocab_size, emb_size = 64, 32
    num_layers, nhead, dim_feedforward = 3, 4, 64
    batch, seq = 2, 8
    alpha, beta = 1.0, 1.0            # deepnorm=False defaults

    key = jax.random.PRNGKey(0)
    k_emb, k_fc_w, k_fc_b, k_tok, *k_layers = jax.random.split(key, 4 + num_layers)

    params = dict(
        embedding=_xavier(k_emb, (vocab_size, emb_size), emb_size, vocab_size, beta),
        pos_encoding=make_positional_encoding(emb_size),
        fc_w=_xavier(k_fc_w, (emb_size, vocab_size), emb_size, vocab_size, beta),
        fc_b=jax.random.normal(k_fc_b, (1, vocab_size), jnp.float32) * 0.02,
        layers=[init_layer(k, emb_size, dim_feedforward, nhead, beta) for k in k_layers],
    )

    tokens = jax.random.randint(k_tok, (batch, seq), 0, vocab_size, dtype=jnp.int32)

    ref = encoder_lm_ref(tokens, params, nhead=nhead, alpha=alpha, beta=beta)

    # Production configuration: bf16 MXU operands + bf16 inter-layer carry, f32 accumulation.
    prep_bf16 = prepare_encoder_lm_params(params, nhead=nhead, beta=beta,
                                          matmul_dtype=jnp.bfloat16)
    out = encoder_lm_forward(tokens, prep_bf16, alpha=alpha)
    out = jax.block_until_ready(out)
    assert out.shape == (batch, seq, vocab_size), out.shape
    # Tolerance sized for bf16 matmul operands AND a bf16 layer-to-layer carry.
    rel_err = float(jnp.max(jnp.abs(out - ref) / (1.0 + jnp.abs(ref))))
    assert rel_err < 1e-1, f"bf16 relative err {rel_err}"

    # Full-f32 matmul path (f32 carry): tight check of the forward-pass semantics.
    prep_f32 = prepare_encoder_lm_params(params, nhead=nhead, beta=beta,
                                         matmul_dtype=jnp.float32)
    out32 = encoder_lm_forward(tokens, prep_f32, alpha=alpha)
    out32 = jax.block_until_ready(out32)
    max_err = float(jnp.max(jnp.abs(out32 - ref)))
    assert max_err < 1e-2, f"f32 max abs err {max_err}"

    print("KERNEL_OK")
</pallas_src>

<mosaic_0001>
module attributes {stable_mosaic.version = 11 : i64} {
  func.func @encoder_stack_kernel(%arg0: i32, %arg1: i32, %arg2: memref<2x8x32xbf16, #tpu.memory_space<vmem>>, %arg3: memref<1x32x96xbf16, #tpu.memory_space<vmem>>, %arg4: memref<1x1x96xf32, #tpu.memory_space<vmem>>, %arg5: memref<1x32x32xbf16, #tpu.memory_space<vmem>>, %arg6: memref<1x1x32xf32, #tpu.memory_space<vmem>>, %arg7: memref<1x1x32xf32, #tpu.memory_space<vmem>>, %arg8: memref<1x1x32xf32, #tpu.memory_space<vmem>>, %arg9: memref<1x32x64xbf16, #tpu.memory_space<vmem>>, %arg10: memref<1x1x64xf32, #tpu.memory_space<vmem>>, %arg11: memref<1x64x32xbf16, #tpu.memory_space<vmem>>, %arg12: memref<1x1x32xf32, #tpu.memory_space<vmem>>, %arg13: memref<1x1x32xf32, #tpu.memory_space<vmem>>, %arg14: memref<1x1x32xf32, #tpu.memory_space<vmem>>, %arg15: memref<2x8x32xbf16, #tpu.memory_space<vmem>>) attributes {dimension_semantics = [#tpu.dimension_semantics<parallel>, #tpu.dimension_semantics<arbitrary>], iteration_bounds = array<i64: 1, 3>, scalar_prefetch = 0 : i64, scratch_operands = 0 : i64, tpu.core_type = #tpu.core_type<tc>, window_params = [{transform_indices = @transform_0, window_bounds = array<i64: 2, 8, 32>}, {transform_indices = @transform_1, window_bounds = array<i64: 1, 32, 96>}, {transform_indices = @transform_2, window_bounds = array<i64: 1, 1, 96>}, {transform_indices = @transform_3, window_bounds = array<i64: 1, 32, 32>}, {transform_indices = @transform_4, window_bounds = array<i64: 1, 1, 32>}, {transform_indices = @transform_5, window_bounds = array<i64: 1, 1, 32>}, {transform_indices = @transform_6, window_bounds = array<i64: 1, 1, 32>}, {transform_indices = @transform_7, window_bounds = array<i64: 1, 32, 64>}, {transform_indices = @transform_8, window_bounds = array<i64: 1, 1, 64>}, {transform_indices = @transform_9, window_bounds = array<i64: 1, 64, 32>}, {transform_indices = @transform_10, window_bounds = array<i64: 1, 1, 32>}, {transform_indices = @transform_11, window_bounds = array<i64: 1, 1, 32>}, {transform_indices = @transform_12, window_bounds = array<i64: 1, 1, 32>}, {transform_indices = @transform_13, window_bounds = array<i64: 2, 8, 32>}]} {
    %c0_i32 = arith.constant 0 : i32
    %0 = arith.cmpi eq, %arg1, %c0_i32 : i32
    %1 = arith.extui %0 : i1 to i32
    %c0_i32_0 = arith.constant 0 : i32
    %2 = arith.cmpi ne, %1, %c0_i32_0 : i32
    scf.if %2 {
      %c0_96 = arith.constant 0 : index
      %c0_97 = arith.constant 0 : index
      %c0_98 = arith.constant 0 : index
      %236 = vector.load %arg2[%c0_96, %c0_97, %c0_98] : memref<2x8x32xbf16, #tpu.memory_space<vmem>>, vector<2x8x32xbf16>
      %c0_99 = arith.constant 0 : index
      %c0_100 = arith.constant 0 : index
      %c0_101 = arith.constant 0 : index
      %237 = vector.load %arg15[%c0_99, %c0_100, %c0_101] : memref<2x8x32xbf16, #tpu.memory_space<vmem>>, vector<2x8x32xbf16>
      tpu.vector_store %arg15[%c0_99, %c0_100, %c0_101], %236 {strides = array<i32>} : memref<2x8x32xbf16, #tpu.memory_space<vmem>>, vector<2x8x32xbf16>,
    } else {
    }
    %c0 = arith.constant 0 : index
    %c0_1 = arith.constant 0 : index
    %c0_2 = arith.constant 0 : index
    %3 = vector.load %arg15[%c0, %c0_1, %c0_2] : memref<2x8x32xbf16, #tpu.memory_space<vmem>>, vector<2x8x32xbf16>
    %4 = vector.shape_cast %3 : vector<2x8x32xbf16> to vector<16x32xbf16>
    %5 = arith.extf %4 : vector<16x32xbf16> to vector<16x32xf32>
    %c0_3 = arith.constant 0 : index
    %c0_4 = arith.constant 0 : index
    %c0_5 = arith.constant 0 : index
    %6 = vector.load %arg3[%c0_3, %c0_4, %c0_5] : memref<1x32x96xbf16, #tpu.memory_space<vmem>>, vector<1x32x96xbf16>
    %7 = vector.shape_cast %6 : vector<1x32x96xbf16> to vector<32x96xbf16>
    %cst = arith.constant dense<0.000000e+00> : vector<16x96xf32>
    %8 = tpu.matmul %4, %7, %cst {dimension_numbers = #tpu.dot_dimension_numbers<[1], [0], [0], [1], [0, 0, 1, 1], [], []>} : vector<16x32xbf16>, vector<32x96xbf16>, vector<16x96xf32> -> vector<16x96xf32>
    %c0_6 = arith.constant 0 : index
    %c0_7 = arith.constant 0 : index
    %c0_8 = arith.constant 0 : index
    %9 = vector.load %arg4[%c0_6, %c0_7, %c0_8] : memref<1x1x96xf32, #tpu.memory_space<vmem>>, vector<1x1x96xf32>
    %10 = vector.shape_cast %9 : vector<1x1x96xf32> to vector<1x96xf32>
    %11 = vector.broadcast %10 : vector<1x96xf32> to vector<16x96xf32>
    %12 = arith.addf %8, %11 : vector<16x96xf32>
    %13 = vector.extract_strided_slice %12 {offsets = [0, 0], sizes = [16, 32], strides = [1, 1]} : vector<16x96xf32> to vector<16x32xf32>
    %14 = vector.shape_cast %13 : vector<16x32xf32> to vector<2x8x32xf32>
    %15 = arith.truncf %14 : vector<2x8x32xf32> to vector<2x8x32xbf16>
    %16 = vector.extract_strided_slice %12 {offsets = [0, 32], sizes = [16, 32], strides = [1, 1]} : vector<16x96xf32> to vector<16x32xf32>
    %17 = vector.shape_cast %16 : vector<16x32xf32> to vector<2x8x32xf32>
    %18 = arith.truncf %17 : vector<2x8x32xf32> to vector<2x8x32xbf16>
    %19 = vector.extract_strided_slice %12 {offsets = [0, 64], sizes = [16, 32], strides = [1, 1]} : vector<16x96xf32> to vector<16x32xf32>
    %20 = vector.shape_cast %19 : vector<16x32xf32> to vector<2x8x32xf32>
    %21 = arith.truncf %20 : vector<2x8x32xf32> to vector<2x8x32xbf16>
    %22 = vector.extract_strided_slice %15 {offsets = [0, 0, 0], sizes = [2, 8, 8], strides = [1, 1, 1]} : vector<2x8x32xbf16> to vector<2x8x8xbf16>
    %23 = vector.extract_strided_slice %18 {offsets = [0, 0, 0], sizes = [2, 8, 8], strides = [1, 1, 1]} : vector<2x8x32xbf16> to vector<2x8x8xbf16>
    %24 = vector.extract_strided_slice %21 {offsets = [0, 0, 0], sizes = [2, 8, 8], strides = [1, 1, 1]} : vector<2x8x32xbf16> to vector<2x8x8xbf16>
    "tpu.trace_start"() <{level = 10 : i32, message = "bqd,bkd->bqk"}> : () -> ()
    %cst_9 = arith.constant dense<0.000000e+00> : vector<2x8x8xf32>
    %25 = tpu.matmul %22, %23, %cst_9 {dimension_numbers = #tpu.dot_dimension_numbers<[2], [2], [1], [1], [0, 0, 0, 1, 1, 1], [0], [0]>} : vector<2x8x8xbf16>, vector<2x8x8xbf16>, vector<2x8x8xf32> -> vector<2x8x8xf32>
    "tpu.trace_stop"() : () -> ()
    %cst_10 = arith.constant 0.353553385 : f32
    %26 = vector.broadcast %cst_10 : f32 to vector<2x8x8xf32>
    %27 = arith.mulf %25, %26 : vector<2x8x8xf32>
    %cst_11 = arith.constant dense<0xFF800000> : vector<2x8xf32>
    %28 = vector.multi_reduction <maximumf>, %27, %cst_11 [2] : vector<2x8x8xf32> to vector<2x8xf32>
    %29 = vector.shape_cast %28 : vector<2x8xf32> to vector<2x8x1xf32>
    %30 = vector.broadcast %29 : vector<2x8x1xf32> to vector<2x8x8xf32>
    %31 = arith.subf %27, %30 : vector<2x8x8xf32>
    %32 = math.exp %31 : vector<2x8x8xf32>
    %cst_12 = arith.constant dense<0.000000e+00> : vector<2x8xf32>
    %33 = vector.multi_reduction <add>, %32, %cst_12 [2] : vector<2x8x8xf32> to vector<2x8xf32>
    %34 = vector.shape_cast %33 : vector<2x8xf32> to vector<2x8x1xf32>
    %35 = tpu.reciprocal %34 {approx = true} : vector<2x8x1xf32> -> vector<2x8x1xf32>
    %36 = arith.mulf %34, %35 : vector<2x8x1xf32>
    %cst_13 = arith.constant 2.000000e+00 : f32
    %37 = vector.broadcast %cst_13 : f32 to vector<2x8x1xf32>
    %38 = arith.subf %37, %36 : vector<2x8x1xf32>
    %39 = arith.mulf %35, %38 : vector<2x8x1xf32>
    %40 = vector.broadcast %39 : vector<2x8x1xf32> to vector<2x8x8xf32>
    %41 = arith.mulf %32, %40 : vector<2x8x8xf32>
    %42 = arith.truncf %41 : vector<2x8x8xf32> to vector<2x8x8xbf16>
    "tpu.trace_start"() <{level = 10 : i32, message = "bqk,bkd->bqd"}> : () -> ()
    %cst_14 = arith.constant dense<0.000000e+00> : vector<2x8x8xf32>
    %43 = tpu.matmul %42, %24, %cst_14 {dimension_numbers = #tpu.dot_dimension_numbers<[2], [1], [1], [2], [0, 0, 0, 1, 1, 2], [0], [0]>} : vector<2x8x8xbf16>, vector<2x8x8xbf16>, vector<2x8x8xf32> -> vector<2x8x8xf32>
    "tpu.trace_stop"() : () -> ()
    %44 = vector.extract_strided_slice %15 {offsets = [0, 0, 8], sizes = [2, 8, 8], strides = [1, 1, 1]} : vector<2x8x32xbf16> to vector<2x8x8xbf16>
    %45 = vector.extract_strided_slice %18 {offsets = [0, 0, 8], sizes = [2, 8, 8], strides = [1, 1, 1]} : vector<2x8x32xbf16> to vector<2x8x8xbf16>
    %46 = vector.extract_strided_slice %21 {offsets = [0, 0, 8], sizes = [2, 8, 8], strides = [1, 1, 1]} : vector<2x8x32xbf16> to vector<2x8x8xbf16>
    "tpu.trace_start"() <{level = 10 : i32, message = "bqd,bkd->bqk"}> : () -> ()
    %cst_15 = arith.constant dense<0.000000e+00> : vector<2x8x8xf32>
    %47 = tpu.matmul %44, %45, %cst_15 {dimension_numbers = #tpu.dot_dimension_numbers<[2], [2], [1], [1], [0, 0, 0, 1, 1, 1], [0], [0]>} : vector<2x8x8xbf16>, vector<2x8x8xbf16>, vector<2x8x8xf32> -> vector<2x8x8xf32>
    "tpu.trace_stop"() : () -> ()
    %cst_16 = arith.constant 0.353553385 : f32
    %48 = vector.broadcast %cst_16 : f32 to vector<2x8x8xf32>
    %49 = arith.mulf %47, %48 : vector<2x8x8xf32>
    %cst_17 = arith.constant dense<0xFF800000> : vector<2x8xf32>
    %50 = vector.multi_reduction <maximumf>, %49, %cst_17 [2] : vector<2x8x8xf32> to vector<2x8xf32>
    %51 = vector.shape_cast %50 : vector<2x8xf32> to vector<2x8x1xf32>
    %52 = vector.broadcast %51 : vector<2x8x1xf32> to vector<2x8x8xf32>
    %53 = arith.subf %49, %52 : vector<2x8x8xf32>
    %54 = math.exp %53 : vector<2x8x8xf32>
    %cst_18 = arith.constant dense<0.000000e+00> : vector<2x8xf32>
    %55 = vector.multi_reduction <add>, %54, %cst_18 [2] : vector<2x8x8xf32> to vector<2x8xf32>
    %56 = vector.shape_cast %55 : vector<2x8xf32> to vector<2x8x1xf32>
    %57 = tpu.reciprocal %56 {approx = true} : vector<2x8x1xf32> -> vector<2x8x1xf32>
    %58 = arith.mulf %56, %57 : vector<2x8x1xf32>
    %cst_19 = arith.constant 2.000000e+00 : f32
    %59 = vector.broadcast %cst_19 : f32 to vector<2x8x1xf32>
    %60 = arith.subf %59, %58 : vector<2x8x1xf32>
    %61 = arith.mulf %57, %60 : vector<2x8x1xf32>
    %62 = vector.broadcast %61 : vector<2x8x1xf32> to vector<2x8x8xf32>
    %63 = arith.mulf %54, %62 : vector<2x8x8xf32>
    %64 = arith.truncf %63 : vector<2x8x8xf32> to vector<2x8x8xbf16>
    "tpu.trace_start"() <{level = 10 : i32, message = "bqk,bkd->bqd"}> : () -> ()
    %cst_20 = arith.constant dense<0.000000e+00> : vector<2x8x8xf32>
    %65 = tpu.matmul %64, %46, %cst_20 {dimension_numbers = #tpu.dot_dimension_numbers<[2], [1], [1], [2], [0, 0, 0, 1, 1, 2], [0], [0]>} : vector<2x8x8xbf16>, vector<2x8x8xbf16>, vector<2x8x8xf32> -> vector<2x8x8xf32>
    "tpu.trace_stop"() : () -> ()
    %66 = vector.extract_strided_slice %15 {offsets = [0, 0, 16], sizes = [2, 8, 8], strides = [1, 1, 1]} : vector<2x8x32xbf16> to vector<2x8x8xbf16>
    %67 = vector.extract_strided_slice %18 {offsets = [0, 0, 16], sizes = [2, 8, 8], strides = [1, 1, 1]} : vector<2x8x32xbf16> to vector<2x8x8xbf16>
    %68 = vector.extract_strided_slice %21 {offsets = [0, 0, 16], sizes = [2, 8, 8], strides = [1, 1, 1]} : vector<2x8x32xbf16> to vector<2x8x8xbf16>
    "tpu.trace_start"() <{level = 10 : i32, message = "bqd,bkd->bqk"}> : () -> ()
    %cst_21 = arith.constant dense<0.000000e+00> : vector<2x8x8xf32>
    %69 = tpu.matmul %66, %67, %cst_21 {dimension_numbers = #tpu.dot_dimension_numbers<[2], [2], [1], [1], [0, 0, 0, 1, 1, 1], [0], [0]>} : vector<2x8x8xbf16>, vector<2x8x8xbf16>, vector<2x8x8xf32> -> vector<2x8x8xf32>
    "tpu.trace_stop"() : () -> ()
    %cst_22 = arith.constant 0.353553385 : f32
    %70 = vector.broadcast %cst_22 : f32 to vector<2x8x8xf32>
    %71 = arith.mulf %69, %70 : vector<2x8x8xf32>
    %cst_23 = arith.constant dense<0xFF800000> : vector<2x8xf32>
    %72 = vector.multi_reduction <maximumf>, %71, %cst_23 [2] : vector<2x8x8xf32> to vector<2x8xf32>
    %73 = vector.shape_cast %72 : vector<2x8xf32> to vector<2x8x1xf32>
    %74 = vector.broadcast %73 : vector<2x8x1xf32> to vector<2x8x8xf32>
    %75 = arith.subf %71, %74 : vector<2x8x8xf32>
    %76 = math.exp %75 : vector<2x8x8xf32>
    %cst_24 = arith.constant dense<0.000000e+00> : vector<2x8xf32>
    %77 = vector.multi_reduction <add>, %76, %cst_24 [2] : vector<2x8x8xf32> to vector<2x8xf32>
    %78 = vector.shape_cast %77 : vector<2x8xf32> to vector<2x8x1xf32>
    %79 = tpu.reciprocal %78 {approx = true} : vector<2x8x1xf32> -> vector<2x8x1xf32>
    %80 = arith.mulf %78, %79 : vector<2x8x1xf32>
    %cst_25 = arith.constant 2.000000e+00 : f32
    %81 = vector.broadcast %cst_25 : f32 to vector<2x8x1xf32>
    %82 = arith.subf %81, %80 : vector<2x8x1xf32>
    %83 = arith.mulf %79, %82 : vector<2x8x1xf32>
    %84 = vector.broadcast %83 : vector<2x8x1xf32> to vector<2x8x8xf32>
    %85 = arith.mulf %76, %84 : vector<2x8x8xf32>
    %86 = arith.truncf %85 : vector<2x8x8xf32> to vector<2x8x8xbf16>
    "tpu.trace_start"() <{level = 10 : i32, message = "bqk,bkd->bqd"}> : () -> ()
    %cst_26 = arith.constant dense<0.000000e+00> : vector<2x8x8xf32>
    %87 = tpu.matmul %86, %68, %cst_26 {dimension_numbers = #tpu.dot_dimension_numbers<[2], [1], [1], [2], [0, 0, 0, 1, 1, 2], [0], [0]>} : vector<2x8x8xbf16>, vector<2x8x8xbf16>, vector<2x8x8xf32> -> vector<2x8x8xf32>
    "tpu.trace_stop"() : () -> ()
    %88 = vector.extract_strided_slice %15 {offsets = [0, 0, 24], sizes = [2, 8, 8], strides = [1, 1, 1]} : vector<2x8x32xbf16> to vector<2x8x8xbf16>
    %89 = vector.extract_strided_slice %18 {offsets = [0, 0, 24], sizes = [2, 8, 8], strides = [1, 1, 1]} : vector<2x8x32xbf16> to vector<2x8x8xbf16>
    %90 = vector.extract_strided_slice %21 {offsets = [0, 0, 24], sizes = [2, 8, 8], strides = [1, 1, 1]} : vector<2x8x32xbf16> to vector<2x8x8xbf16>
    "tpu.trace_start"() <{level = 10 : i32, message = "bqd,bkd->bqk"}> : () -> ()
    %cst_27 = arith.constant dense<0.000000e+00> : vector<2x8x8xf32>
    %91 = tpu.matmul %88, %89, %cst_27 {dimension_numbers = #tpu.dot_dimension_numbers<[2], [2], [1], [1], [0, 0, 0, 1, 1, 1], [0], [0]>} : vector<2x8x8xbf16>, vector<2x8x8xbf16>, vector<2x8x8xf32> -> vector<2x8x8xf32>
    "tpu.trace_stop"() : () -> ()
    %cst_28 = arith.constant 0.353553385 : f32
    %92 = vector.broadcast %cst_28 : f32 to vector<2x8x8xf32>
    %93 = arith.mulf %91, %92 : vector<2x8x8xf32>
    %cst_29 = arith.constant dense<0xFF800000> : vector<2x8xf32>
    %94 = vector.multi_reduction <maximumf>, %93, %cst_29 [2] : vector<2x8x8xf32> to vector<2x8xf32>
    %95 = vector.shape_cast %94 : vector<2x8xf32> to vector<2x8x1xf32>
    %96 = vector.broadcast %95 : vector<2x8x1xf32> to vector<2x8x8xf32>
    %97 = arith.subf %93, %96 : vector<2x8x8xf32>
    %98 = math.exp %97 : vector<2x8x8xf32>
    %cst_30 = arith.constant dense<0.000000e+00> : vector<2x8xf32>
    %99 = vector.multi_reduction <add>, %98, %cst_30 [2] : vector<2x8x8xf32> to vector<2x8xf32>
    %100 = vector.shape_cast %99 : vector<2x8xf32> to vector<2x8x1xf32>
    %101 = tpu.reciprocal %100 {approx = true} : vector<2x8x1xf32> -> vector<2x8x1xf32>
    %102 = arith.mulf %100, %101 : vector<2x8x1xf32>
    %cst_31 = arith.constant 2.000000e+00 : f32
    %103 = vector.broadcast %cst_31 : f32 to vector<2x8x1xf32>
    %104 = arith.subf %103, %102 : vector<2x8x1xf32>
    %105 = arith.mulf %101, %104 : vector<2x8x1xf32>
    %106 = vector.broadcast %105 : vector<2x8x1xf32> to vector<2x8x8xf32>
    %107 = arith.mulf %98, %106 : vector<2x8x8xf32>
    %108 = arith.truncf %107 : vector<2x8x8xf32> to vector<2x8x8xbf16>
    "tpu.trace_start"() <{level = 10 : i32, message = "bqk,bkd->bqd"}> : () -> ()
    %cst_32 = arith.constant dense<0.000000e+00> : vector<2x8x8xf32>
    %109 = tpu.matmul %108, %90, %cst_32 {dimension_numbers = #tpu.dot_dimension_numbers<[2], [1], [1], [2], [0, 0, 0, 1, 1, 2], [0], [0]>} : vector<2x8x8xbf16>, vector<2x8x8xbf16>, vector<2x8x8xf32> -> vector<2x8x8xf32>
    "tpu.trace_stop"() : () -> ()
    %110 = tpu.concatenate %43, %65, %87, %109 in 2 : vector<2x8x8xf32>, vector<2x8x8xf32>, vector<2x8x8xf32>, vector<2x8x8xf32> -> vector<2x8x32xf32>
    %111 = vector.shape_cast %110 : vector<2x8x32xf32> to vector<16x32xf32>
    %112 = arith.truncf %111 : vector<16x32xf32> to vector<16x32xbf16>
    %c0_33 = arith.constant 0 : index
    %c0_34 = arith.constant 0 : index
    %c0_35 = arith.constant 0 : index
    %113 = vector.load %arg5[%c0_33, %c0_34, %c0_35] : memref<1x32x32xbf16, #tpu.memory_space<vmem>>, vector<1x32x32xbf16>
    %114 = vector.shape_cast %113 : vector<1x32x32xbf16> to vector<32x32xbf16>
    %cst_36 = arith.constant dense<0.000000e+00> : vector<16x32xf32>
    %115 = tpu.matmul %112, %114, %cst_36 {dimension_numbers = #tpu.dot_dimension_numbers<[1], [0], [0], [1], [0, 0, 1, 1], [], []>} : vector<16x32xbf16>, vector<32x32xbf16>, vector<16x32xf32> -> vector<16x32xf32>
    %c0_37 = arith.constant 0 : index
    %c0_38 = arith.constant 0 : index
    %c0_39 = arith.constant 0 : index
    %116 = vector.load %arg6[%c0_37, %c0_38, %c0_39] : memref<1x1x32xf32, #tpu.memory_space<vmem>>, vector<1x1x32xf32>
    %117 = vector.shape_cast %116 : vector<1x1x32xf32> to vector<1x32xf32>
    %118 = vector.broadcast %117 : vector<1x32xf32> to vector<16x32xf32>
    %119 = arith.addf %115, %118 : vector<16x32xf32>
    %cst_40 = arith.constant 1.000000e+00 : f32
    %120 = vector.broadcast %cst_40 : f32 to vector<16x32xf32>
    %121 = arith.mulf %120, %5 : vector<16x32xf32>
    %122 = arith.addf %121, %119 : vector<16x32xf32>
    %c0_41 = arith.constant 0 : index
    %c0_42 = arith.constant 0 : index
    %c0_43 = arith.constant 0 : index
    %123 = vector.load %arg7[%c0_41, %c0_42, %c0_43] : memref<1x1x32xf32, #tpu.memory_space<vmem>>, vector<1x1x32xf32>
    %124 = vector.shape_cast %123 : vector<1x1x32xf32> to vector<1x32xf32>
    %c0_44 = arith.constant 0 : index
    %c0_45 = arith.constant 0 : index
    %c0_46 = arith.constant 0 : index
    %125 = vector.load %arg8[%c0_44, %c0_45, %c0_46] : memref<1x1x32xf32, #tpu.memory_space<vmem>>, vector<1x1x32xf32>
    %126 = vector.shape_cast %125 : vector<1x1x32xf32> to vector<1x32xf32>
    %cst_47 = arith.constant dense<0.000000e+00> : vector<16xf32>
    %127 = vector.multi_reduction <add>, %122, %cst_47 [1] : vector<16x32xf32> to vector<16xf32>
    %128 = vector.shape_cast %127 : vector<16xf32> to vector<16x1xf32>
    %cst_48 = arith.constant 3.200000e+01 : f32
    %129 = vector.broadcast %cst_48 : f32 to vector<16x1xf32>
    %130 = arith.divf %128, %129 : vector<16x1xf32>
    %131 = vector.broadcast %130 : vector<16x1xf32> to vector<16x32xf32>
    %132 = arith.subf %122, %131 : vector<16x32xf32>
    %133 = arith.mulf %132, %132 : vector<16x32xf32>
    %cst_49 = arith.constant dense<0.000000e+00> : vector<16xf32>
    %134 = vector.multi_reduction <add>, %133, %cst_49 [1] : vector<16x32xf32> to vector<16xf32>
    %135 = vector.shape_cast %134 : vector<16xf32> to vector<16x1xf32>
    %cst_50 = arith.constant 3.200000e+01 : f32
    %136 = vector.broadcast %cst_50 : f32 to vector<16x1xf32>
    %137 = arith.divf %135, %136 : vector<16x1xf32>
    %cst_51 = arith.constant 9.99999974E-6 : f32
    %138 = vector.broadcast %cst_51 : f32 to vector<16x1xf32>
    %139 = arith.addf %137, %138 : vector<16x1xf32>
    %140 = math.rsqrt %139 : vector<16x1xf32>
    %141 = vector.broadcast %140 : vector<16x1xf32> to vector<16x32xf32>
    %142 = arith.mulf %132, %141 : vector<16x32xf32>
    %143 = vector.broadcast %124 : vector<1x32xf32> to vector<16x32xf32>
    %144 = arith.mulf %142, %143 : vector<16x32xf32>
    %145 = vector.broadcast %126 : vector<1x32xf32> to vector<16x32xf32>
    %146 = arith.addf %144, %145 : vector<16x32xf32>
    %147 = arith.truncf %146 : vector<16x32xf32> to vector<16x32xbf16>
    %c0_52 = arith.constant 0 : index
    %c0_53 = arith.constant 0 : index
    %c0_54 = arith.constant 0 : index
    %148 = vector.load %arg9[%c0_52, %c0_53, %c0_54] : memref<1x32x64xbf16, #tpu.memory_space<vmem>>, vector<1x32x64xbf16>
    %149 = vector.shape_cast %148 : vector<1x32x64xbf16> to vector<32x64xbf16>
    %cst_55 = arith.constant dense<0.000000e+00> : vector<16x64xf32>
    %150 = tpu.matmul %147, %149, %cst_55 {dimension_numbers = #tpu.dot_dimension_numbers<[1], [0], [0], [1], [0, 0, 1, 1], [], []>} : vector<16x32xbf16>, vector<32x64xbf16>, vector<16x64xf32> -> vector<16x64xf32>
    %c0_56 = arith.constant 0 : index
    %c0_57 = arith.constant 0 : index
    %c0_58 = arith.constant 0 : index
    %151 = vector.load %arg10[%c0_56, %c0_57, %c0_58] : memref<1x1x64xf32, #tpu.memory_space<vmem>>, vector<1x1x64xf32>
    %152 = vector.shape_cast %151 : vector<1x1x64xf32> to vector<1x64xf32>
    %153 = vector.broadcast %152 : vector<1x64xf32> to vector<16x64xf32>
    %154 = arith.addf %150, %153 : vector<16x64xf32>
    %cst_59 = arith.constant 5.000000e-01 : f32
    %155 = vector.broadcast %cst_59 : f32 to vector<16x64xf32>
    %156 = arith.mulf %155, %154 : vector<16x64xf32>
    %cst_60 = arith.constant 0.707106769 : f32
    %157 = vector.broadcast %cst_60 : f32 to vector<16x64xf32>
    %158 = arith.mulf %154, %157 : vector<16x64xf32>
    %159 = math.absf %158 : vector<16x64xf32>
    %cst_61 = arith.constant 0.327591091 : f32
    %160 = vector.broadcast %cst_61 : f32 to vector<16x64xf32>
    %161 = arith.mulf %160, %159 : vector<16x64xf32>
    %cst_62 = arith.constant 1.000000e+00 : f32
    %162 = vector.broadcast %cst_62 : f32 to vector<16x64xf32>
    %163 = arith.addf %162, %161 : vector<16x64xf32>
    %164 = tpu.reciprocal %163 {approx = true} : vector<16x64xf32> -> vector<16x64xf32>
    %165 = arith.mulf %163, %164 : vector<16x64xf32>
    %cst_63 = arith.constant 2.000000e+00 : f32
    %166 = vector.broadcast %cst_63 : f32 to vector<16x64xf32>
    %167 = arith.subf %166, %165 : vector<16x64xf32>
    %168 = arith.mulf %164, %167 : vector<16x64xf32>
    %cst_64 = arith.constant 1.06140542 : f32
    %169 = vector.broadcast %cst_64 : f32 to vector<16x64xf32>
    %170 = arith.mulf %169, %168 : vector<16x64xf32>
    %cst_65 = arith.constant -1.45315206 : f32
    %171 = vector.broadcast %cst_65 : f32 to vector<16x64xf32>
    %172 = arith.addf %170, %171 : vector<16x64xf32>
    %173 = arith.mulf %172, %168 : vector<16x64xf32>
    %cst_66 = arith.constant 1.42141378 : f32
    %174 = vector.broadcast %cst_66 : f32 to vector<16x64xf32>
    %175 = arith.addf %173, %174 : vector<16x64xf32>
    %176 = arith.mulf %175, %168 : vector<16x64xf32>
    %cst_67 = arith.constant -0.284496725 : f32
    %177 = vector.broadcast %cst_67 : f32 to vector<16x64xf32>
    %178 = arith.addf %176, %177 : vector<16x64xf32>
    %179 = arith.mulf %178, %168 : vector<16x64xf32>
    %cst_68 = arith.constant 0.254829586 : f32
    %180 = vector.broadcast %cst_68 : f32 to vector<16x64xf32>
    %181 = arith.addf %179, %180 : vector<16x64xf32>
    %182 = arith.mulf %181, %168 : vector<16x64xf32>
    %cst_69 = arith.constant 0.000000e+00 : f32
    %183 = vector.broadcast %cst_69 : f32 to vector<16x64xf32>
    %184 = arith.subf %183, %159 : vector<16x64xf32>
    %185 = arith.mulf %184, %159 : vector<16x64xf32>
    %186 = math.exp %185 : vector<16x64xf32>
    %187 = arith.mulf %182, %186 : vector<16x64xf32>
    %cst_70 = arith.constant 1.000000e+00 : f32
    %188 = vector.broadcast %cst_70 : f32 to vector<16x64xf32>
    %189 = arith.subf %188, %187 : vector<16x64xf32>
    %cst_71 = arith.constant 0.000000e+00 : f32
    %190 = vector.broadcast %cst_71 : f32 to vector<16x64xf32>
    %191 = arith.cmpf oge, %158, %190 : vector<16x64xf32>
    %cst_72 = arith.constant 0.000000e+00 : f32
    %192 = vector.broadcast %cst_72 : f32 to vector<16x64xf32>
    %193 = arith.subf %192, %189 : vector<16x64xf32>
    %194 = arith.select %191, %189, %193 : vector<16x64xi1>, vector<16x64xf32>
    %cst_73 = arith.constant 1.000000e+00 : f32
    %195 = vector.broadcast %cst_73 : f32 to vector<16x64xf32>
    %196 = arith.addf %195, %194 : vector<16x64xf32>
    %197 = arith.mulf %156, %196 : vector<16x64xf32>
    %198 = arith.truncf %197 : vector<16x64xf32> to vector<16x64xbf16>
    %c0_74 = arith.constant 0 : index
    %c0_75 = arith.constant 0 : index
    %c0_76 = arith.constant 0 : index
    %199 = vector.load %arg11[%c0_74, %c0_75, %c0_76] : memref<1x64x32xbf16, #tpu.memory_space<vmem>>, vector<1x64x32xbf16>
    %200 = vector.shape_cast %199 : vector<1x64x32xbf16> to vector<64x32xbf16>
    %cst_77 = arith.constant dense<0.000000e+00> : vector<16x32xf32>
    %201 = tpu.matmul %198, %200, %cst_77 {dimension_numbers = #tpu.dot_dimension_numbers<[1], [0], [0], [1], [0, 0, 1, 1], [], []>} : vector<16x64xbf16>, vector<64x32xbf16>, vector<16x32xf32> -> vector<16x32xf32>
    %c0_78 = arith.constant 0 : index
    %c0_79 = arith.constant 0 : index
    %c0_80 = arith.constant 0 : index
    %202 = vector.load %arg12[%c0_78, %c0_79, %c0_80] : memref<1x1x32xf32, #tpu.memory_space<vmem>>, vector<1x1x32xf32>
    %203 = vector.shape_cast %202 : vector<1x1x32xf32> to vector<1x32xf32>
    %204 = vector.broadcast %203 : vector<1x32xf32> to vector<16x32xf32>
    %205 = arith.addf %201, %204 : vector<16x32xf32>
    %cst_81 = arith.constant 1.000000e+00 : f32
    %206 = vector.broadcast %cst_81 : f32 to vector<16x32xf32>
    %207 = arith.mulf %206, %146 : vector<16x32xf32>
    %208 = arith.addf %207, %205 : vector<16x32xf32>
    %c0_82 = arith.constant 0 : index
    %c0_83 = arith.constant 0 : index
    %c0_84 = arith.constant 0 : index
    %209 = vector.load %arg13[%c0_82, %c0_83, %c0_84] : memref<1x1x32xf32, #tpu.memory_space<vmem>>, vector<1x1x32xf32>
    %210 = vector.shape_cast %209 : vector<1x1x32xf32> to vector<1x32xf32>
    %c0_85 = arith.constant 0 : index
    %c0_86 = arith.constant 0 : index
    %c0_87 = arith.constant 0 : index
    %211 = vector.load %arg14[%c0_85, %c0_86, %c0_87] : memref<1x1x32xf32, #tpu.memory_space<vmem>>, vector<1x1x32xf32>
    %212 = vector.shape_cast %211 : vector<1x1x32xf32> to vector<1x32xf32>
    %cst_88 = arith.constant dense<0.000000e+00> : vector<16xf32>
    %213 = vector.multi_reduction <add>, %208, %cst_88 [1] : vector<16x32xf32> to vector<16xf32>
    %214 = vector.shape_cast %213 : vector<16xf32> to vector<16x1xf32>
    %cst_89 = arith.constant 3.200000e+01 : f32
    %215 = vector.broadcast %cst_89 : f32 to vector<16x1xf32>
    %216 = arith.divf %214, %215 : vector<16x1xf32>
    %217 = vector.broadcast %216 : vector<16x1xf32> to vector<16x32xf32>
    %218 = arith.subf %208, %217 : vector<16x32xf32>
    %219 = arith.mulf %218, %218 : vector<16x32xf32>
    %cst_90 = arith.constant dense<0.000000e+00> : vector<16xf32>
    %220 = vector.multi_reduction <add>, %219, %cst_90 [1] : vector<16x32xf32> to vector<16xf32>
    %221 = vector.shape_cast %220 : vector<16xf32> to vector<16x1xf32>
    %cst_91 = arith.constant 3.200000e+01 : f32
    %222 = vector.broadcast %cst_91 : f32 to vector<16x1xf32>
    %223 = arith.divf %221, %222 : vector<16x1xf32>
    %cst_92 = arith.constant 9.99999974E-6 : f32
    %224 = vector.broadcast %cst_92 : f32 to vector<16x1xf32>
    %225 = arith.addf %223, %224 : vector<16x1xf32>
    %226 = math.rsqrt %225 : vector<16x1xf32>
    %227 = vector.broadcast %226 : vector<16x1xf32> to vector<16x32xf32>
    %228 = arith.mulf %218, %227 : vector<16x32xf32>
    %229 = vector.broadcast %210 : vector<1x32xf32> to vector<16x32xf32>
    %230 = arith.mulf %228, %229 : vector<16x32xf32>
    %231 = vector.broadcast %212 : vector<1x32xf32> to vector<16x32xf32>
    %232 = arith.addf %230, %231 : vector<16x32xf32>
    %233 = arith.truncf %232 : vector<16x32xf32> to vector<16x32xbf16>
    %234 = vector.shape_cast %233 : vector<16x32xbf16> to vector<2x8x32xbf16>
    %c0_93 = arith.constant 0 : index
    %c0_94 = arith.constant 0 : index
    %c0_95 = arith.constant 0 : index
    %235 = vector.load %arg15[%c0_93, %c0_94, %c0_95] : memref<2x8x32xbf16, #tpu.memory_space<vmem>>, vector<2x8x32xbf16>
    tpu.vector_store %arg15[%c0_93, %c0_94, %c0_95], %234 {strides = array<i32>} : memref<2x8x32xbf16, #tpu.memory_space<vmem>>, vector<2x8x32xbf16>,
    return
  }
  func.func @transform_0(%arg0: i32, %arg1: i32) -> (i32, i32, i32) {
    %c0_i32 = arith.constant 0 : i32
    %c0_i32_0 = arith.constant 0 : i32
    %c0_i32_1 = arith.constant 0 : i32
    return %arg0, %c0_i32, %c0_i32_0 : i32, i32, i32
  }
  func.func @transform_1(%arg0: i32, %arg1: i32) -> (i32, i32, i32) {
    %c0_i32 = arith.constant 0 : i32
    %c0_i32_0 = arith.constant 0 : i32
    %c0_i32_1 = arith.constant 0 : i32
    return %arg1, %c0_i32, %c0_i32_0 : i32, i32, i32
  }
  func.func @transform_2(%arg0: i32, %arg1: i32) -> (i32, i32, i32) {
    %c0_i32 = arith.constant 0 : i32
    %c0_i32_0 = arith.constant 0 : i32
    %c0_i32_1 = arith.constant 0 : i32
    return %arg1, %c0_i32, %c0_i32_0 : i32, i32, i32
  }
  func.func @transform_3(%arg0: i32, %arg1: i32) -> (i32, i32, i32) {
    %c0_i32 = arith.constant 0 : i32
    %c0_i32_0 = arith.constant 0 : i32
    %c0_i32_1 = arith.constant 0 : i32
    return %arg1, %c0_i32, %c0_i32_0 : i32, i32, i32
  }
  func.func @transform_4(%arg0: i32, %arg1: i32) -> (i32, i32, i32) {
    %c0_i32 = arith.constant 0 : i32
    %c0_i32_0 = arith.constant 0 : i32
    %c0_i32_1 = arith.constant 0 : i32
    return %arg1, %c0_i32, %c0_i32_0 : i32, i32, i32
  }
  func.func @transform_5(%arg0: i32, %arg1: i32) -> (i32, i32, i32) {
    %c0_i32 = arith.constant 0 : i32
    %c0_i32_0 = arith.constant 0 : i32
    %c0_i32_1 = arith.constant 0 : i32
    return %arg1, %c0_i32, %c0_i32_0 : i32, i32, i32
  }
  func.func @transform_6(%arg0: i32, %arg1: i32) -> (i32, i32, i32) {
    %c0_i32 = arith.constant 0 : i32
    %c0_i32_0 = arith.constant 0 : i32
    %c0_i32_1 = arith.constant 0 : i32
    return %arg1, %c0_i32, %c0_i32_0 : i32, i32, i32
  }
  func.func @transform_7(%arg0: i32, %arg1: i32) -> (i32, i32, i32) {
    %c0_i32 = arith.constant 0 : i32
    %c0_i32_0 = arith.constant 0 : i32
    %c0_i32_1 = arith.constant 0 : i32
    return %arg1, %c0_i32, %c0_i32_0 : i32, i32, i32
  }
  func.func @transform_8(%arg0: i32, %arg1: i32) -> (i32, i32, i32) {
    %c0_i32 = arith.constant 0 : i32
    %c0_i32_0 = arith.constant 0 : i32
    %c0_i32_1 = arith.constant 0 : i32
    return %arg1, %c0_i32, %c0_i32_0 : i32, i32, i32
  }
  func.func @transform_9(%arg0: i32, %arg1: i32) -> (i32, i32, i32) {
    %c0_i32 = arith.constant 0 : i32
    %c0_i32_0 = arith.constant 0 : i32
    %c0_i32_1 = arith.constant 0 : i32
    return %arg1, %c0_i32, %c0_i32_0 : i32, i32, i32
  }
  func.func @transform_10(%arg0: i32, %arg1: i32) -> (i32, i32, i32) {
    %c0_i32 = arith.constant 0 : i32
    %c0_i32_0 = arith.constant 0 : i32
    %c0_i32_1 = arith.constant 0 : i32
    return %arg1, %c0_i32, %c0_i32_0 : i32, i32, i32
  }
  func.func @transform_11(%arg0: i32, %arg1: i32) -> (i32, i32, i32) {
    %c0_i32 = arith.constant 0 : i32
    %c0_i32_0 = arith.constant 0 : i32
    %c0_i32_1 = arith.constant 0 : i32
    return %arg1, %c0_i32, %c0_i32_0 : i32, i32, i32
  }
  func.func @transform_12(%arg0: i32, %arg1: i32) -> (i32, i32, i32) {
    %c0_i32 = arith.constant 0 : i32
    %c0_i32_0 = arith.constant 0 : i32
    %c0_i32_1 = arith.constant 0 : i32
    return %arg1, %c0_i32, %c0_i32_0 : i32, i32, i32
  }
  func.func @transform_13(%arg0: i32, %arg1: i32) -> (i32, i32, i32) {
    %c0_i32 = arith.constant 0 : i32
    %c0_i32_0 = arith.constant 0 : i32
    %c0_i32_1 = arith.constant 0 : i32
    return %arg0, %c0_i32, %c0_i32_0 : i32, i32, i32
  }
}

</mosaic_0001>

<llo_original>
// kernel: tpu_custom_call.1
$region0: #{tpu_custom_call.1}
  #allocation0 [shape = 'u32[]', space=smem, size = 0x4, offset = 0x4, fixed_abs, tag = 'smem constant byte address 0x4 - core index']
  #allocation1 [shape = 'u32[144,128]{1,0:T(1,128)}', space=vmem, size = 0x12000, scoped, tag = 'internal scratch']
  %s0 = inlined_call_operand.hbm [shape: bf16[2,8,32], index: 0, kind: input, shape index: {}]
  %s1 = inlined_call_operand.hbm [shape: bf16[3,32,96], index: 1, kind: input, shape index: {}]
  %s2 = inlined_call_operand.hbm [shape: f32[3,1,96], index: 2, kind: input, shape index: {}]
  %s3 = inlined_call_operand.hbm [shape: bf16[3,32,32], index: 3, kind: input, shape index: {}]
  %s4 = inlined_call_operand.hbm [shape: f32[3,1,32], index: 4, kind: input, shape index: {}]
  %s5 = inlined_call_operand.hbm [shape: f32[3,1,32], index: 5, kind: input, shape index: {}]
  %s6 = inlined_call_operand.hbm [shape: f32[3,1,32], index: 6, kind: input, shape index: {}]
  %s7 = inlined_call_operand.hbm [shape: bf16[3,32,64], index: 7, kind: input, shape index: {}]
  %s8 = inlined_call_operand.hbm [shape: f32[3,1,64], index: 8, kind: input, shape index: {}]
  %s9 = inlined_call_operand.hbm [shape: bf16[3,64,32], index: 9, kind: input, shape index: {}]
  %s10 = inlined_call_operand.hbm [shape: f32[3,1,32], index: 10, kind: input, shape index: {}]
  %s11 = inlined_call_operand.hbm [shape: f32[3,1,32], index: 11, kind: input, shape index: {}]
  %s12 = inlined_call_operand.hbm [shape: f32[3,1,32], index: 12, kind: input, shape index: {}]
  %s13 = inlined_call_operand.hbm [shape: bf16[2,8,32], index: 13, kind: output, shape index: {}]
  %s14 = sld [smem:[#allocation0]]
  $region141: #{tpu_custom_call.1} parent=0
    _
  %s16 = ssub.s32 1, %s14
  %s17 = scalar_select 0, %s16, %s14
  $region1: #{tpu_custom_call.1} parent=0
    #allocation2 [shape = 'u8[4096]{0}', space=vmem, size = 0x1000, scoped, tag = 'input window, operand 0, single buffered']
    #allocation3 [shape = 's32[2]{0}', space=sflag, size = 0x8, scoped, tag = 'scoped memory for tpu_custom_call.1']
    #allocation4 [shape = 's32[2]{0}', space=sflag, size = 0x8, scoped, tag = 'scoped memory for tpu_custom_call.1']
    #allocation5 [shape = 'u8[16384]{0}', space=vmem, size = 0x4000, scoped, tag = 'input window, operand 1']
    #allocation6 [shape = 's32[2]{0}', space=sflag, size = 0x8, scoped, tag = 'scoped memory for tpu_custom_call.1']
    #allocation7 [shape = 'u8[1024]{0}', space=vmem, size = 0x400, scoped, tag = 'input window, operand 2']
    #allocation8 [shape = 'u8[16384]{0}', space=vmem, size = 0x4000, scoped, tag = 'input window, operand 3']
    #allocation9 [shape = 's32[2]{0}', space=sflag, size = 0x8, scoped, tag = 'scoped memory for tpu_custom_call.1']
    #allocation10 [shape = 'u8[1024]{0}', space=vmem, size = 0x400, scoped, tag = 'input window, operand 4']
    #allocation11 [shape = 'u8[1024]{0}', space=vmem, size = 0x400, scoped, tag = 'input window, operand 5']
    #allocation12 [shape = 's32[2]{0}', space=sflag, size = 0x8, scoped, tag = 'scoped memory for tpu_custom_call.1']
    #allocation13 [shape = 'u8[1024]{0}', space=vmem, size = 0x400, scoped, tag = 'input window, operand 6']
    #allocation14 [shape = 'u8[16384]{0}', space=vmem, size = 0x4000, scoped, tag = 'input window, operand 7']
    #allocation15 [shape = 's32[2]{0}', space=sflag, size = 0x8, scoped, tag = 'scoped memory for tpu_custom_call.1']
    #allocation16 [shape = 'u8[1024]{0}', space=vmem, size = 0x400, scoped, tag = 'input window, operand 8']
    #allocation17 [shape = 'u8[32768]{0}', space=vmem, size = 0x8000, scoped, tag = 'input window, operand 9']
    #allocation18 [shape = 's32[2]{0}', space=sflag, size = 0x8, scoped, tag = 'scoped memory for tpu_custom_call.1']
    #allocation19 [shape = 'u8[1024]{0}', space=vmem, size = 0x400, scoped, tag = 'input window, operand 10']
    #allocation20 [shape = 'u8[1024]{0}', space=vmem, size = 0x400, scoped, tag = 'input window, operand 11']
    #allocation21 [shape = 's32[2]{0}', space=sflag, size = 0x8, scoped, tag = 'scoped memory for tpu_custom_call.1']
    #allocation22 [shape = 'u8[1024]{0}', space=vmem, size = 0x400, scoped, tag = 'input window, operand 12']
    #allocation23 [shape = 'u8[4096]{0}', space=vmem, size = 0x1000, scoped, tag = 'output window, operand 0, single buffered']
    %18 = vsyncpa [#allocation3], 0
    %19 = vsyncpa [#allocation6], 0
    %s20 = scalar_lea.sflag [#allocation6], 1
    %21 = vsyncpa %s20, 0
    %22 = vsyncpa [#allocation9], 0
    %s23 = scalar_lea.sflag [#allocation9], 1
    %24 = vsyncpa %s23, 0
    %25 = vsyncpa [#allocation12], 0
    %s26 = scalar_lea.sflag [#allocation12], 1
    %27 = vsyncpa %s26, 0
    %28 = vsyncpa [#allocation15], 0
    %s29 = scalar_lea.sflag [#allocation15], 1
    %30 = vsyncpa %s29, 0
    %31 = vsyncpa [#allocation18], 0
    %s32 = scalar_lea.sflag [#allocation18], 1
    %33 = vsyncpa %s32, 0
    %34 = vsyncpa [#allocation21], 0
    %s35 = scalar_lea.sflag [#allocation21], 1
    %36 = vsyncpa %s35, 0
    %37 = vsyncpa [#allocation4], 0
    loop: start=0, step=1, limit=5
    $region2: #{tpu_custom_call.1} parent=1 // loop_pre_header
      _
    $region3: #{tpu_custom_call.1} parent=1 // loop_header
      %s39 = sphi 0, %s43
      %p40 = scmp.ge.s32.totalorder %s39, 5
      %s46 = sphi 0, %s58
      %s47 = sphi 0, %s54
      %s48 = sphi 0, %s46
      %s49 = sphi 0, %s47
      %s50 = sphi 0, %s48
      %s51 = sphi 0, %s49
      %s61 = sphi 0, %s63
      %s64 = sphi 0, %s61
      %s65 = sphi 0, %s64
      %s81 = sphi 0, %s65
      %s87 = sphi 0, %s89
      %s90 = sphi 0, %s87
      %s91 = sphi 0, %s90
      %s107 = sphi 0, %s91
      %s113 = sphi 0, %s115
      %s116 = sphi 0, %s113
      %s117 = sphi 0, %s116
      %s133 = sphi 0, %s117
      %s139 = sphi 0, %s141
      %s142 = sphi 0, %s139
      %s143 = sphi 0, %s142
      %s159 = sphi 0, %s143
      %s165 = sphi 0, %s167
      %s168 = sphi 0, %s165
      %s169 = sphi 0, %s168
      %s185 = sphi 0, %s169
      %s191 = sphi 0, %s193
      %s194 = sphi 0, %s191
      %s195 = sphi 0, %s194
      %s211 = sphi 0, %s195
      %s217 = sphi 0, %s219
      %s220 = sphi 0, %s217
      %s221 = sphi 0, %s220
      %s237 = sphi 0, %s221
      %s243 = sphi 0, %s245
      %s246 = sphi 0, %s243
      %s247 = sphi 0, %s246
      %s263 = sphi 0, %s247
      %s269 = sphi 0, %s271
      %s272 = sphi 0, %s269
      %s273 = sphi 0, %s272
      %s289 = sphi 0, %s273
      %s295 = sphi 0, %s297
      %s298 = sphi 0, %s295
      %s299 = sphi 0, %s298
      %s315 = sphi 0, %s299
      %s321 = sphi 0, %s323
      %s324 = sphi 0, %s321
      %s325 = sphi 0, %s324
      %s341 = sphi 0, %s325
      %s347 = sphi 0, %s349
      %s350 = sphi 0, %s347
      %s351 = sphi 0, %s350
      %s367 = sphi 0, %s351
      %s373 = sphi 0, %s375
      %s376 = sphi 0, %s373
      %s377 = sphi 0, %s376
      %s393 = sphi 0, %s377
      %s399 = sphi 0, %s401
      %s402 = sphi 0, %s399
      %s403 = sphi 0, %s402
      %s419 = sphi 0, %s403
    $region4: #{tpu_custom_call.1} parent=1 // loop_header_branch
      %42 = sbr.rel (%p40) target = $region8
    $region5: #{tpu_custom_call.1} parent=1 // loop_body
      %s44 = ssub.s32 %s39, 1
      %s45 = ssub.s32 %s39, 2
      %s52 = sadd.s32 1, %s47
      %p53 = scmp.ge.s32.totalorder %s52, 3
      %s54 = scalar_select %p53, 0, %s52
      %s55 = sadd.s32 1, %s46
      %s56 = scalar_select %p53, %s55, %s46
      %p57 = scmp.ge.s32.totalorder %s56, 1
      %s58 = scalar_select %p57, 0, %s56
      %s59 = ssub.s32 %s46, %s58
      %p60 = scmp.eq.s32.totalorder %s59, 0
      %s62 = sadd.s32 %s61, 1
      %s63 = scalar_select %p60, %s61, %s62
      %p66 = pneg %p60
      %p67 = scmp.eq.s32.totalorder %s39, 2
      %p68 = por %p66, %p67
      %p69 = scmp.ne.s32.totalorder %s61, %s64
      %p70 = scmp.eq.s32.totalorder %s39, 0
      %p71 = por %p69, %p70
      %p72 = scmp.ne.s32.totalorder %s61, %s64
      %p73 = scmp.eq.s32.totalorder %s44, 2
      %p74 = por %p72, %p73
      %p75 = scmp.ne.s32.totalorder %s64, %s65
      %p76 = scmp.eq.s32.totalorder %s44, 0
      %p77 = por %p75, %p76
      %p78 = scmp.ne.s32.totalorder %s64, %s65
      %p79 = scmp.eq.s32.totalorder %s45, 2
      %p80 = por %p78, %p79
      %p82 = scmp.ne.s32.totalorder %s65, %s81
      %p83 = scmp.eq.s32.totalorder %s45, 0
      %p84 = por %p82, %p83
      %s85 = ssub.s32 %s47, %s54
      %p86 = scmp.eq.s32.totalorder %s85, 0
      %s88 = sadd.s32 %s87, 1
      %s89 = scalar_select %p86, %s87, %s88
      %p92 = pneg %p86
      %p93 = scmp.eq.s32.totalorder %s39, 2
      %p94 = por %p92, %p93
      %p95 = scmp.ne.s32.totalorder %s87, %s90
      %p96 = scmp.eq.s32.totalorder %s39, 0
      %p97 = por %p95, %p96
      %p98 = scmp.ne.s32.totalorder %s87, %s90
      %p99 = scmp.eq.s32.totalorder %s44, 2
      %p100 = por %p98, %p99
      %p101 = scmp.ne.s32.totalorder %s90, %s91
      %p102 = scmp.eq.s32.totalorder %s44, 0
      %p103 = por %p101, %p102
      %p104 = scmp.ne.s32.totalorder %s90, %s91
      %p105 = scmp.eq.s32.totalorder %s45, 2
      %p106 = por %p104, %p105
      %p108 = scmp.ne.s32.totalorder %s91, %s107
      %p109 = scmp.eq.s32.totalorder %s45, 0
      %p110 = por %p108, %p109
      %s111 = ssub.s32 %s47, %s54
      %p112 = scmp.eq.s32.totalorder %s111, 0
      %s114 = sadd.s32 %s113, 1
      %s115 = scalar_select %p112, %s113, %s114
      %p118 = pneg %p112
      %p119 = scmp.eq.s32.totalorder %s39, 2
      %p120 = por %p118, %p119
      %p121 = scmp.ne.s32.totalorder %s113, %s116
      %p122 = scmp.eq.s32.totalorder %s39, 0
      %p123 = por %p121, %p122
      %p124 = scmp.ne.s32.totalorder %s113, %s116
      %p125 = scmp.eq.s32.totalorder %s44, 2
      %p126 = por %p124, %p125
      %p127 = scmp.ne.s32.totalorder %s116, %s117
      %p128 = scmp.eq.s32.totalorder %s44, 0
      %p129 = por %p127, %p128
      %p130 = scmp.ne.s32.totalorder %s116, %s117
      %p131 = scmp.eq.s32.totalorder %s45, 2
      %p132 = por %p130, %p131
      %p134 = scmp.ne.s32.totalorder %s117, %s133
      %p135 = scmp.eq.s32.totalorder %s45, 0
      %p136 = por %p134, %p135
      %s137 = ssub.s32 %s47, %s54
      %p138 = scmp.eq.s32.totalorder %s137, 0
      %s140 = sadd.s32 %s139, 1
      %s141 = scalar_select %p138, %s139, %s140
      %p144 = pneg %p138
      %p145 = scmp.eq.s32.totalorder %s39, 2
      %p146 = por %p144, %p145
      %p147 = scmp.ne.s32.totalorder %s139, %s142
      %p148 = scmp.eq.s32.totalorder %s39, 0
      %p149 = por %p147, %p148
      %p150 = scmp.ne.s32.totalorder %s139, %s142
      %p151 = scmp.eq.s32.totalorder %s44, 2
      %p152 = por %p150, %p151
      %p153 = scmp.ne.s32.totalorder %s142, %s143
      %p154 = scmp.eq.s32.totalorder %s44, 0
      %p155 = por %p153, %p154
      %p156 = scmp.ne.s32.totalorder %s142, %s143
      %p157 = scmp.eq.s32.totalorder %s45, 2
      %p158 = por %p156, %p157
      %p160 = scmp.ne.s32.totalorder %s143, %s159
      %p161 = scmp.eq.s32.totalorder %s45, 0
      %p162 = por %p160, %p161
      %s163 = ssub.s32 %s47, %s54
      %p164 = scmp.eq.s32.totalorder %s163, 0
      %s166 = sadd.s32 %s165, 1
      %s167 = scalar_select %p164, %s165, %s166
      %p170 = pneg %p164
      %p171 = scmp.eq.s32.totalorder %s39, 2
      %p172 = por %p170, %p171
      %p173 = scmp.ne.s32.totalorder %s165, %s168
      %p174 = scmp.eq.s32.totalorder %s39, 0
      %p175 = por %p173, %p174
      %p176 = scmp.ne.s32.totalorder %s165, %s168
      %p177 = scmp.eq.s32.totalorder %s44, 2
      %p178 = por %p176, %p177
      %p179 = scmp.ne.s32.totalorder %s168, %s169
      %p180 = scmp.eq.s32.totalorder %s44, 0
      %p181 = por %p179, %p180
      %p182 = scmp.ne.s32.totalorder %s168, %s169
      %p183 = scmp.eq.s32.totalorder %s45, 2
      %p184 = por %p182, %p183
      %p186 = scmp.ne.s32.totalorder %s169, %s185
      %p187 = scmp.eq.s32.totalorder %s45, 0
      %p188 = por %p186, %p187
      %s189 = ssub.s32 %s47, %s54
      %p190 = scmp.eq.s32.totalorder %s189, 0
      %s192 = sadd.s32 %s191, 1
      %s193 = scalar_select %p190, %s191, %s192
      %p196 = pneg %p190
      %p197 = scmp.eq.s32.totalorder %s39, 2
      %p198 = por %p196, %p197
      %p199 = scmp.ne.s32.totalorder %s191, %s194
      %p200 = scmp.eq.s32.totalorder %s39, 0
      %p201 = por %p199, %p200
      %p202 = scmp.ne.s32.totalorder %s191, %s194
      %p203 = scmp.eq.s32.totalorder %s44, 2
      %p204 = por %p202, %p203
      %p205 = scmp.ne.s32.totalorder %s194, %s195
      %p206 = scmp.eq.s32.totalorder %s44, 0
      %p207 = por %p205, %p206
      %p208 = scmp.ne.s32.totalorder %s194, %s195
      %p209 = scmp.eq.s32.totalorder %s45, 2
      %p210 = por %p208, %p209
      %p212 = scmp.ne.s32.totalorder %s195, %s211
      %p213 = scmp.eq.s32.totalorder %s45, 0
      %p214 = por %p212, %p213
      %s215 = ssub.s32 %s47, %s54
      %p216 = scmp.eq.s32.totalorder %s215, 0
      %s218 = sadd.s32 %s217, 1
      %s219 = scalar_select %p216, %s217, %s218
      %p222 = pneg %p216
      %p223 = scmp.eq.s32.totalorder %s39, 2
      %p224 = por %p222, %p223
      %p225 = scmp.ne.s32.totalorder %s217, %s220
      %p226 = scmp.eq.s32.totalorder %s39, 0
      %p227 = por %p225, %p226
      %p228 = scmp.ne.s32.totalorder %s217, %s220
      %p229 = scmp.eq.s32.totalorder %s44, 2
      %p230 = por %p228, %p229
      %p231 = scmp.ne.s32.totalorder %s220, %s221
      %p232 = scmp.eq.s32.totalorder %s44, 0
      %p233 = por %p231, %p232
      %p234 = scmp.ne.s32.totalorder %s220, %s221
      %p235 = scmp.eq.s32.totalorder %s45, 2
      %p236 = por %p234, %p235
      %p238 = scmp.ne.s32.totalorder %s221, %s237
      %p239 = scmp.eq.s32.totalorder %s45, 0
      %p240 = por %p238, %p239
      %s241 = ssub.s32 %s47, %s54
      %p242 = scmp.eq.s32.totalorder %s241, 0
      %s244 = sadd.s32 %s243, 1
      %s245 = scalar_select %p242, %s243, %s244
      %p248 = pneg %p242
      %p249 = scmp.eq.s32.totalorder %s39, 2
      %p250 = por %p248, %p249
      %p251 = scmp.ne.s32.totalorder %s243, %s246
      %p252 = scmp.eq.s32.totalorder %s39, 0
      %p253 = por %p251, %p252
      %p254 = scmp.ne.s32.totalorder %s243, %s246
      %p255 = scmp.eq.s32.totalorder %s44, 2
      %p256 = por %p254, %p255
      %p257 = scmp.ne.s32.totalorder %s246, %s247
      %p258 = scmp.eq.s32.totalorder %s44, 0
      %p259 = por %p257, %p258
      %p260 = scmp.ne.s32.totalorder %s246, %s247
      %p261 = scmp.eq.s32.totalorder %s45, 2
      %p262 = por %p260, %p261
      %p264 = scmp.ne.s32.totalorder %s247, %s263
      %p265 = scmp.eq.s32.totalorder %s45, 0
      %p266 = por %p264, %p265
      %s267 = ssub.s32 %s47, %s54
      %p268 = scmp.eq.s32.totalorder %s267, 0
      %s270 = sadd.s32 %s269, 1
      %s271 = scalar_select %p268, %s269, %s270
      %p274 = pneg %p268
      %p275 = scmp.eq.s32.totalorder %s39, 2
      %p276 = por %p274, %p275
      %p277 = scmp.ne.s32.totalorder %s269, %s272
      %p278 = scmp.eq.s32.totalorder %s39, 0
      %p279 = por %p277, %p278
      %p280 = scmp.ne.s32.totalorder %s269, %s272
      %p281 = scmp.eq.s32.totalorder %s44, 2
      %p282 = por %p280, %p281
      %p283 = scmp.ne.s32.totalorder %s272, %s273
      %p284 = scmp.eq.s32.totalorder %s44, 0
      %p285 = por %p283, %p284
      %p286 = scmp.ne.s32.totalorder %s272, %s273
      %p287 = scmp.eq.s32.totalorder %s45, 2
      %p288 = por %p286, %p287
      %p290 = scmp.ne.s32.totalorder %s273, %s289
      %p291 = scmp.eq.s32.totalorder %s45, 0
      %p292 = por %p290, %p291
      %s293 = ssub.s32 %s47, %s54
      %p294 = scmp.eq.s32.totalorder %s293, 0
      %s296 = sadd.s32 %s295, 1
      %s297 = scalar_select %p294, %s295, %s296
      %p300 = pneg %p294
      %p301 = scmp.eq.s32.totalorder %s39, 2
      %p302 = por %p300, %p301
      %p303 = scmp.ne.s32.totalorder %s295, %s298
      %p304 = scmp.eq.s32.totalorder %s39, 0
      %p305 = por %p303, %p304
      %p306 = scmp.ne.s32.totalorder %s295, %s298
      %p307 = scmp.eq.s32.totalorder %s44, 2
      %p308 = por %p306, %p307
      %p309 = scmp.ne.s32.totalorder %s298, %s299
      %p310 = scmp.eq.s32.totalorder %s44, 0
      %p311 = por %p309, %p310
      %p312 = scmp.ne.s32.totalorder %s298, %s299
      %p313 = scmp.eq.s32.totalorder %s45, 2
      %p314 = por %p312, %p313
      %p316 = scmp.ne.s32.totalorder %s299, %s315
      %p317 = scmp.eq.s32.totalorder %s45, 0
      %p318 = por %p316, %p317
      %s319 = ssub.s32 %s47, %s54
      %p320 = scmp.eq.s32.totalorder %s319, 0
      %s322 = sadd.s32 %s321, 1
      %s323 = scalar_select %p320, %s321, %s322
      %p326 = pneg %p320
      %p327 = scmp.eq.s32.totalorder %s39, 2
      %p328 = por %p326, %p327
      %p329 = scmp.ne.s32.totalorder %s321, %s324
      %p330 = scmp.eq.s32.totalorder %s39, 0
      %p331 = por %p329, %p330
      %p332 = scmp.ne.s32.totalorder %s321, %s324
      %p333 = scmp.eq.s32.totalorder %s44, 2
      %p334 = por %p332, %p333
      %p335 = scmp.ne.s32.totalorder %s324, %s325
      %p336 = scmp.eq.s32.totalorder %s44, 0
      %p337 = por %p335, %p336
      %p338 = scmp.ne.s32.totalorder %s324, %s325
      %p339 = scmp.eq.s32.totalorder %s45, 2
      %p340 = por %p338, %p339
      %p342 = scmp.ne.s32.totalorder %s325, %s341
      %p343 = scmp.eq.s32.totalorder %s45, 0
      %p344 = por %p342, %p343
      %s345 = ssub.s32 %s47, %s54
      %p346 = scmp.eq.s32.totalorder %s345, 0
      %s348 = sadd.s32 %s347, 1
      %s349 = scalar_select %p346, %s347, %s348
      %p352 = pneg %p346
      %p353 = scmp.eq.s32.totalorder %s39, 2
      %p354 = por %p352, %p353
      %p355 = scmp.ne.s32.totalorder %s347, %s350
      %p356 = scmp.eq.s32.totalorder %s39, 0
      %p357 = por %p355, %p356
      %p358 = scmp.ne.s32.totalorder %s347, %s350
      %p359 = scmp.eq.s32.totalorder %s44, 2
      %p360 = por %p358, %p359
      %p361 = scmp.ne.s32.totalorder %s350, %s351
      %p362 = scmp.eq.s32.totalorder %s44, 0
      %p363 = por %p361, %p362
      %p364 = scmp.ne.s32.totalorder %s350, %s351
      %p365 = scmp.eq.s32.totalorder %s45, 2
      %p366 = por %p364, %p365
      %p368 = scmp.ne.s32.totalorder %s351, %s367
      %p369 = scmp.eq.s32.totalorder %s45, 0
      %p370 = por %p368, %p369
      %s371 = ssub.s32 %s47, %s54
      %p372 = scmp.eq.s32.totalorder %s371, 0
      %s374 = sadd.s32 %s373, 1
      %s375 = scalar_select %p372, %s373, %s374
      %p378 = pneg %p372
      %p379 = scmp.eq.s32.totalorder %s39, 2
      %p380 = por %p378, %p379
      %p381 = scmp.ne.s32.totalorder %s373, %s376
      %p382 = scmp.eq.s32.totalorder %s39, 0
      %p383 = por %p381, %p382
      %p384 = scmp.ne.s32.totalorder %s373, %s376
      %p385 = scmp.eq.s32.totalorder %s44, 2
      %p386 = por %p384, %p385
      %p387 = scmp.ne.s32.totalorder %s376, %s377
      %p388 = scmp.eq.s32.totalorder %s44, 0
      %p389 = por %p387, %p388
      %p390 = scmp.ne.s32.totalorder %s376, %s377
      %p391 = scmp.eq.s32.totalorder %s45, 2
      %p392 = por %p390, %p391
      %p394 = scmp.ne.s32.totalorder %s377, %s393
      %p395 = scmp.eq.s32.totalorder %s45, 0
      %p396 = por %p394, %p395
      %s397 = ssub.s32 %s46, %s58
      %p398 = scmp.eq.s32.totalorder %s397, 0
      %s400 = sadd.s32 %s399, 1
      %s401 = scalar_select %p398, %s399, %s400
      %p404 = pneg %p398
      %p405 = scmp.eq.s32.totalorder %s39, 2
      %p406 = por %p404, %p405
      %p407 = scmp.ne.s32.totalorder %s399, %s402
      %p408 = scmp.eq.s32.totalorder %s39, 0
      %p409 = por %p407, %p408
      %p410 = scmp.ne.s32.totalorder %s399, %s402
      %p411 = scmp.eq.s32.totalorder %s44, 2
      %p412 = por %p410, %p411
      %p413 = scmp.ne.s32.totalorder %s402, %s403
      %p414 = scmp.eq.s32.totalorder %s44, 0
      %p415 = por %p413, %p414
      %p416 = scmp.ne.s32.totalorder %s402, %s403
      %p417 = scmp.eq.s32.totalorder %s45, 2
      %p418 = por %p416, %p417
      %p420 = scmp.ne.s32.totalorder %s403, %s419
      %p421 = scmp.eq.s32.totalorder %s45, 0
      %p422 = por %p420, %p421
      %p423 = scmp.le.s32.totalorder 1, %s39
      %p424 = scmp.lt.s32.totalorder %s39, 4
      %p425 = pnand %p423, %p424
      %p426 = pneg %p425
      // Predicated region
      $region9: #{tpu_custom_call.1} parent=5 // pred_check
        _
      $region10: #{tpu_custom_call.1} parent=5 // pred_check_branch
        %428 = sbr.rel (%p425) target = $region12
      $region11: #{tpu_custom_call.1} parent=5 // pred_region
        %s429 = ssub.s32 %s39, 1
        // Predicated region
        $region13: #{tpu_custom_call.1} parent=11 // pred_check
          %p430 = pneg %p77
        $region14: #{tpu_custom_call.1} parent=11 // pred_check_branch
          %432 = sbr.rel (%p430) target = $region16
        $region15: #{tpu_custom_call.1} parent=11 // pred_region
          %s433 = smul.u32 2, %s48
          %s435 = ssub.s32 128, 128
          %436 = vsyncadd [#allocation3], %s435
          %s437 = smul.addr %s433, 64
          %s438 = scalar_lea.hbm %s0, %s437
          %s439 = sshll.u32 [#allocation2], 4
          %s440 = int_to_ptr.vmem [resolvable:$true] %s439
          %445 = dma.hbm_to_vmem [thread:$0]  %s438, 128, %s440, [#allocation3], 64, 64, 4
        $region16: #{tpu_custom_call.1} parent=11 // pred_fallthru
          _
      $region12: #{tpu_custom_call.1} parent=5 // pred_fallthru
        _
      %p446 = scmp.lt.s32.totalorder %s39, 3
      // Predicated region
      $region17: #{tpu_custom_call.1} parent=5 // pred_check
        %p447 = pneg %p446
      $region18: #{tpu_custom_call.1} parent=5 // pred_check_branch
        %449 = sbr.rel (%p447) target = $region20
      $region19: #{tpu_custom_call.1} parent=5 // pred_region
        // Predicated region
        $region21: #{tpu_custom_call.1} parent=19 // pred_check
          %p450 = pneg %p97
        $region22: #{tpu_custom_call.1} parent=19 // pred_check_branch
          %452 = sbr.rel (%p450) target = $region24
        $region23: #{tpu_custom_call.1} parent=19 // pred_region
          %s453 = sand.u32 %s39, 1
          %s454 = scalar_lea.sflag [#allocation6], %s453
          %s455 = sand.u32 %s87, 1
          %s456 = smul.addr %s455, 16
          %s457 = scalar_lea.vmem [#allocation5], %s456
          %s459 = ssub.s32 256, 256
          %460 = vsyncadd %s454, %s459
          %s461 = smul.addr %s47, 4
          %s462 = smul.addr %s461, 64
          %s463 = scalar_lea.hbm %s1, %s462
          %s464 = sshll.u32 %s457, 4
          %s465 = int_to_ptr.vmem [resolvable:$true] %s464
          %470 = dma.hbm_to_vmem [thread:$0]  %s463, 256, %s465, %s454, 64, 64, 4
        $region24: #{tpu_custom_call.1} parent=19 // pred_fallthru
          _
        // Predicated region
        $region25: #{tpu_custom_call.1} parent=19 // pred_check
          %p471 = pneg %p123
        $region26: #{tpu_custom_call.1} parent=19 // pred_check_branch
          %473 = sbr.rel (%p471) target = $region28
        $region27: #{tpu_custom_call.1} parent=19 // pred_region
          %s474 = sand.u32 %s39, 1
          %s475 = scalar_lea.sflag [#allocation6], %s474
          %s476 = sand.u32 %s113, 1
          %s477 = scalar_lea.vmem [#allocation7], %s476
          %s479 = ssub.s32 16, 16
          %480 = vsyncadd %s475, %s479
          %s481 = smul.addr %s47, 16
          %s482 = scalar_lea.hbm %s2, %s481
          %s484 = sshll.u32 %s477, 4
          %s485 = int_to_ptr.vmem [resolvable:$true] %s484
          %487 = dma.hbm_to_vmem [thread:$0]  %s482, 16, %s485, %s475
        $region28: #{tpu_custom_call.1} parent=19 // pred_fallthru
          _
        // Predicated region
        $region29: #{tpu_custom_call.1} parent=19 // pred_check
          %p488 = pneg %p149
        $region30: #{tpu_custom_call.1} parent=19 // pred_check_branch
          %490 = sbr.rel (%p488) target = $region32
        $region31: #{tpu_custom_call.1} parent=19 // pred_region
          %s491 = sand.u32 %s39, 1
          %s492 = scalar_lea.sflag [#allocation9], %s491
          %s493 = sand.u32 %s139, 1
          %s494 = smul.addr %s493, 16
          %s495 = scalar_lea.vmem [#allocation8], %s494
          %s497 = ssub.s32 256, 256
          %498 = vsyncadd %s492, %s497
          %s499 = smul.addr %s47, 4
          %s500 = smul.addr %s499, 64
          %s501 = scalar_lea.hbm %s3, %s500
          %s502 = sshll.u32 %s495, 4
          %s503 = int_to_ptr.vmem [resolvable:$true] %s502
          %508 = dma.hbm_to_vmem [thread:$0]  %s501, 256, %s503, %s492, 64, 64, 4
        $region32: #{tpu_custom_call.1} parent=19 // pred_fallthru
          _
        // Predicated region
        $region33: #{tpu_custom_call.1} parent=19 // pred_check
          %p509 = pneg %p175
        $region34: #{tpu_custom_call.1} parent=19 // pred_check_branch
          %511 = sbr.rel (%p509) target = $region36
        $region35: #{tpu_custom_call.1} parent=19 // pred_region
          %s512 = sand.u32 %s39, 1
          %s513 = scalar_lea.sflag [#allocation9], %s512
          %s514 = sand.u32 %s165, 1
          %s515 = scalar_lea.vmem [#allocation10], %s514
          %s517 = ssub.s32 16, 16
          %518 = vsyncadd %s513, %s517
          %s519 = smul.addr %s47, 16
          %s520 = scalar_lea.hbm %s4, %s519
          %s522 = sshll.u32 %s515, 4
          %s523 = int_to_ptr.vmem [resolvable:$true] %s522
          %525 = dma.hbm_to_vmem [thread:$0]  %s520, 16, %s523, %s513
        $region36: #{tpu_custom_call.1} parent=19 // pred_fallthru
          _
        // Predicated region
        $region37: #{tpu_custom_call.1} parent=19 // pred_check
          %p526 = pneg %p201
        $region38: #{tpu_custom_call.1} parent=19 // pred_check_branch
          %528 = sbr.rel (%p526) target = $region40
        $region39: #{tpu_custom_call.1} parent=19 // pred_region
          %s529 = sand.u32 %s39, 1
          %s530 = scalar_lea.sflag [#allocation12], %s529
          %s531 = sand.u32 %s191, 1
          %s532 = scalar_lea.vmem [#allocation11], %s531
          %s534 = ssub.s32 16, 16
          %535 = vsyncadd %s530, %s534
          %s536 = smul.addr %s47, 16
          %s537 = scalar_lea.hbm %s5, %s536
          %s539 = sshll.u32 %s532, 4
          %s540 = int_to_ptr.vmem [resolvable:$true] %s539
          %542 = dma.hbm_to_vmem [thread:$0]  %s537, 16, %s540, %s530
        $region40: #{tpu_custom_call.1} parent=19 // pred_fallthru
          _
        // Predicated region
        $region41: #{tpu_custom_call.1} parent=19 // pred_check
          %p543 = pneg %p227
        $region42: #{tpu_custom_call.1} parent=19 // pred_check_branch
          %545 = sbr.rel (%p543) target = $region44
        $region43: #{tpu_custom_call.1} parent=19 // pred_region
          %s546 = sand.u32 %s39, 1
          %s547 = scalar_lea.sflag [#allocation12], %s546
          %s548 = sand.u32 %s217, 1
          %s549 = scalar_lea.vmem [#allocation13], %s548
          %s551 = ssub.s32 16, 16
          %552 = vsyncadd %s547, %s551
          %s553 = smul.addr %s47, 16
          %s554 = scalar_lea.hbm %s6, %s553
          %s556 = sshll.u32 %s549, 4
          %s557 = int_to_ptr.vmem [resolvable:$true] %s556
          %559 = dma.hbm_to_vmem [thread:$0]  %s554, 16, %s557, %s547
        $region44: #{tpu_custom_call.1} parent=19 // pred_fallthru
          _
        // Predicated region
        $region45: #{tpu_custom_call.1} parent=19 // pred_check
          %p560 = pneg %p253
        $region46: #{tpu_custom_call.1} parent=19 // pred_check_branch
          %562 = sbr.rel (%p560) target = $region48
        $region47: #{tpu_custom_call.1} parent=19 // pred_region
          %s563 = sand.u32 %s39, 1
          %s564 = scalar_lea.sflag [#allocation15], %s563
          %s565 = sand.u32 %s243, 1
          %s566 = smul.addr %s565, 16
          %s567 = scalar_lea.vmem [#allocation14], %s566
          %s569 = ssub.s32 256, 256
          %570 = vsyncadd %s564, %s569
          %s571 = smul.addr %s47, 4
          %s572 = smul.addr %s571, 64
          %s573 = scalar_lea.hbm %s7, %s572
          %s574 = sshll.u32 %s567, 4
          %s575 = int_to_ptr.vmem [resolvable:$true] %s574
          %580 = dma.hbm_to_vmem [thread:$0]  %s573, 256, %s575, %s564, 64, 64, 4
        $region48: #{tpu_custom_call.1} parent=19 // pred_fallthru
          _
        // Predicated region
        $region49: #{tpu_custom_call.1} parent=19 // pred_check
          %p581 = pneg %p279
        $region50: #{tpu_custom_call.1} parent=19 // pred_check_branch
          %583 = sbr.rel (%p581) target = $region52
        $region51: #{tpu_custom_call.1} parent=19 // pred_region
          %s584 = sand.u32 %s39, 1
          %s585 = scalar_lea.sflag [#allocation15], %s584
          %s586 = sand.u32 %s269, 1
          %s587 = scalar_lea.vmem [#allocation16], %s586
          %s589 = ssub.s32 16, 16
          %590 = vsyncadd %s585, %s589
          %s591 = smul.addr %s47, 16
          %s592 = scalar_lea.hbm %s8, %s591
          %s594 = sshll.u32 %s587, 4
          %s595 = int_to_ptr.vmem [resolvable:$true] %s594
          %597 = dma.hbm_to_vmem [thread:$0]  %s592, 16, %s595, %s585
        $region52: #{tpu_custom_call.1} parent=19 // pred_fallthru
          _
        // Predicated region
        $region53: #{tpu_custom_call.1} parent=19 // pred_check
          %p598 = pneg %p305
        $region54: #{tpu_custom_call.1} parent=19 // pred_check_branch
          %600 = sbr.rel (%p598) target = $region56
        $region55: #{tpu_custom_call.1} parent=19 // pred_region
          %s601 = sand.u32 %s39, 1
          %s602 = scalar_lea.sflag [#allocation18], %s601
          %s603 = sand.u32 %s295, 1
          %s604 = smul.addr %s603, 32
          %s605 = scalar_lea.vmem [#allocation17], %s604
          %s607 = ssub.s32 512, 512
          %608 = vsyncadd %s602, %s607
          %s609 = smul.addr %s47, 8
          %s610 = smul.addr %s609, 64
          %s611 = scalar_lea.hbm %s9, %s610
          %s612 = sshll.u32 %s605, 4
          %s613 = int_to_ptr.vmem [resolvable:$true] %s612
          %618 = dma.hbm_to_vmem [thread:$0]  %s611, 512, %s613, %s602, 64, 64, 4
        $region56: #{tpu_custom_call.1} parent=19 // pred_fallthru
          _
        // Predicated region
        $region57: #{tpu_custom_call.1} parent=19 // pred_check
          %p619 = pneg %p331
        $region58: #{tpu_custom_call.1} parent=19 // pred_check_branch
          %621 = sbr.rel (%p619) target = $region60
        $region59: #{tpu_custom_call.1} parent=19 // pred_region
          %s622 = sand.u32 %s39, 1
          %s623 = scalar_lea.sflag [#allocation18], %s622
          %s624 = sand.u32 %s321, 1
          %s625 = scalar_lea.vmem [#allocation19], %s624
          %s627 = ssub.s32 16, 16
          %628 = vsyncadd %s623, %s627
          %s629 = smul.addr %s47, 16
          %s630 = scalar_lea.hbm %s10, %s629
          %s632 = sshll.u32 %s625, 4
          %s633 = int_to_ptr.vmem [resolvable:$true] %s632
          %635 = dma.hbm_to_vmem [thread:$0]  %s630, 16, %s633, %s623
        $region60: #{tpu_custom_call.1} parent=19 // pred_fallthru
          _
        // Predicated region
        $region61: #{tpu_custom_call.1} parent=19 // pred_check
          %p636 = pneg %p357
        $region62: #{tpu_custom_call.1} parent=19 // pred_check_branch
          %638 = sbr.rel (%p636) target = $region64
        $region63: #{tpu_custom_call.1} parent=19 // pred_region
          %s639 = sand.u32 %s39, 1
          %s640 = scalar_lea.sflag [#allocation21], %s639
          %s641 = sand.u32 %s347, 1
          %s642 = scalar_lea.vmem [#allocation20], %s641
          %s644 = ssub.s32 16, 16
          %645 = vsyncadd %s640, %s644
          %s646 = smul.addr %s47, 16
          %s647 = scalar_lea.hbm %s11, %s646
          %s649 = sshll.u32 %s642, 4
          %s650 = int_to_ptr.vmem [resolvable:$true] %s649
          %652 = dma.hbm_to_vmem [thread:$0]  %s647, 16, %s650, %s640
        $region64: #{tpu_custom_call.1} parent=19 // pred_fallthru
          _
        // Predicated region
        $region65: #{tpu_custom_call.1} parent=19 // pred_check
          %p653 = pneg %p383
        $region66: #{tpu_custom_call.1} parent=19 // pred_check_branch
          %655 = sbr.rel (%p653) target = $region68
        $region67: #{tpu_custom_call.1} parent=19 // pred_region
          %s656 = sand.u32 %s39, 1
          %s657 = scalar_lea.sflag [#allocation21], %s656
          %s658 = sand.u32 %s373, 1
          %s659 = scalar_lea.vmem [#allocation22], %s658
          %s661 = ssub.s32 16, 16
          %662 = vsyncadd %s657, %s661
          %s663 = smul.addr %s47, 16
          %s664 = scalar_lea.hbm %s12, %s663
          %s666 = sshll.u32 %s659, 4
          %s667 = int_to_ptr.vmem [resolvable:$true] %s666
          %669 = dma.hbm_to_vmem [thread:$0]  %s664, 16, %s667, %s657
        $region68: #{tpu_custom_call.1} parent=19 // pred_fallthru
          _
      $region20: #{tpu_custom_call.1} parent=5 // pred_fallthru
        _
      %p670 = scmp.le.s32.totalorder 1, %s39
      %p671 = scmp.lt.s32.totalorder %s39, 4
      %p672 = pnand %p670, %p671
      %p673 = pneg %p672
      // Predicated region
      $region69: #{tpu_custom_call.1} parent=5 // pred_check
        _
      $region70: #{tpu_custom_call.1} parent=5 // pred_check_branch
        %675 = sbr.rel (%p672) target = $region72
      $region71: #{tpu_custom_call.1} parent=5 // pred_region
        %s676 = ssub.s32 %s39, 1
        // Predicated region
        $region73: #{tpu_custom_call.1} parent=71 // pred_check
          %p677 = pneg %p77
        $region74: #{tpu_custom_call.1} parent=71 // pred_check_branch
          %679 = sbr.rel (%p677) target = $region76
        $region75: #{tpu_custom_call.1} parent=71 // pred_region
          %680 = dma.done [#allocation3], 128
        $region76: #{tpu_custom_call.1} parent=71 // pred_fallthru
          _
        %s681 = sand.u32 %s44, 1
        %s682 = scalar_lea.sflag [#allocation6], %s681
        %s683 = sand.u32 %s90, 1
        %s684 = smul.addr %s683, 16
        %s685 = scalar_lea.vmem [#allocation5], %s684
        // Predicated region
        $region77: #{tpu_custom_call.1} parent=71 // pred_check
          %p686 = pneg %p103
        $region78: #{tpu_custom_call.1} parent=71 // pred_check_branch
          %688 = sbr.rel (%p686) target = $region80
        $region79: #{tpu_custom_call.1} parent=71 // pred_region
          %689 = dma.done %s682, 256
        $region80: #{tpu_custom_call.1} parent=71 // pred_fallthru
          _
        %s690 = sand.u32 %s44, 1
        %s691 = scalar_lea.sflag [#allocation6], %s690
        %s692 = sand.u32 %s116, 1
        %s693 = scalar_lea.vmem [#allocation7], %s692
        // Predicated region
        $region81: #{tpu_custom_call.1} parent=71 // pred_check
          %p694 = pneg %p129
        $region82: #{tpu_custom_call.1} parent=71 // pred_check_branch
          %696 = sbr.rel (%p694) target = $region84
        $region83: #{tpu_custom_call.1} parent=71 // pred_region
          %697 = dma.done %s691, 16
        $region84: #{tpu_custom_call.1} parent=71 // pred_fallthru
          _
        %s698 = sand.u32 %s44, 1
        %s699 = scalar_lea.sflag [#allocation9], %s698
        %s700 = sand.u32 %s142, 1
        %s701 = smul.addr %s700, 16
        %s702 = scalar_lea.vmem [#allocation8], %s701
        // Predicated region
        $region85: #{tpu_custom_call.1} parent=71 // pred_check
          %p703 = pneg %p155
        $region86: #{tpu_custom_call.1} parent=71 // pred_check_branch
          %705 = sbr.rel (%p703) target = $region88
        $region87: #{tpu_custom_call.1} parent=71 // pred_region
          %706 = dma.done %s699, 256
        $region88: #{tpu_custom_call.1} parent=71 // pred_fallthru
          _
        %s707 = sand.u32 %s44, 1
        %s708 = scalar_lea.sflag [#allocation9], %s707
        %s709 = sand.u32 %s168, 1
        %s710 = scalar_lea.vmem [#allocation10], %s709
        // Predicated region
        $region89: #{tpu_custom_call.1} parent=71 // pred_check
          %p711 = pneg %p181
        $region90: #{tpu_custom_call.1} parent=71 // pred_check_branch
          %713 = sbr.rel (%p711) target = $region92
        $region91: #{tpu_custom_call.1} parent=71 // pred_region
          %714 = dma.done %s708, 16
        $region92: #{tpu_custom_call.1} parent=71 // pred_fallthru
          _
        %s715 = sand.u32 %s44, 1
        %s716 = scalar_lea.sflag [#allocation12], %s715
        %s717 = sand.u32 %s194, 1
        %s718 = scalar_lea.vmem [#allocation11], %s717
        // Predicated region
        $region93: #{tpu_custom_call.1} parent=71 // pred_check
          %p719 = pneg %p207
        $region94: #{tpu_custom_call.1} parent=71 // pred_check_branch
          %721 = sbr.rel (%p719) target = $region96
        $region95: #{tpu_custom_call.1} parent=71 // pred_region
          %722 = dma.done %s716, 16
        $region96: #{tpu_custom_call.1} parent=71 // pred_fallthru
          _
        %s723 = sand.u32 %s44, 1
        %s724 = scalar_lea.sflag [#allocation12], %s723
        %s725 = sand.u32 %s220, 1
        %s726 = scalar_lea.vmem [#allocation13], %s725
        // Predicated region
        $region97: #{tpu_custom_call.1} parent=71 // pred_check
          %p727 = pneg %p233
        $region98: #{tpu_custom_call.1} parent=71 // pred_check_branch
          %729 = sbr.rel (%p727) target = $region100
        $region99: #{tpu_custom_call.1} parent=71 // pred_region
          %730 = dma.done %s724, 16
        $region100: #{tpu_custom_call.1} parent=71 // pred_fallthru
          _
        %s731 = sand.u32 %s44, 1
        %s732 = scalar_lea.sflag [#allocation15], %s731
        %s733 = sand.u32 %s246, 1
        %s734 = smul.addr %s733, 16
        %s735 = scalar_lea.vmem [#allocation14], %s734
        // Predicated region
        $region101: #{tpu_custom_call.1} parent=71 // pred_check
          %p736 = pneg %p259
        $region102: #{tpu_custom_call.1} parent=71 // pred_check_branch
          %738 = sbr.rel (%p736) target = $region104
        $region103: #{tpu_custom_call.1} parent=71 // pred_region
          %739 = dma.done %s732, 256
        $region104: #{tpu_custom_call.1} parent=71 // pred_fallthru
          _
        %s740 = sand.u32 %s44, 1
        %s741 = scalar_lea.sflag [#allocation15], %s740
        %s742 = sand.u32 %s272, 1
        %s743 = scalar_lea.vmem [#allocation16], %s742
        // Predicated region
        $region105: #{tpu_custom_call.1} parent=71 // pred_check
          %p744 = pneg %p285
        $region106: #{tpu_custom_call.1} parent=71 // pred_check_branch
          %746 = sbr.rel (%p744) target = $region108
        $region107: #{tpu_custom_call.1} parent=71 // pred_region
          %747 = dma.done %s741, 16
        $region108: #{tpu_custom_call.1} parent=71 // pred_fallthru
          _
        %s748 = sand.u32 %s44, 1
        %s749 = scalar_lea.sflag [#allocation18], %s748
        %s750 = sand.u32 %s298, 1
        %s751 = smul.addr %s750, 32
        %s752 = scalar_lea.vmem [#allocation17], %s751
        // Predicated region
        $region109: #{tpu_custom_call.1} parent=71 // pred_check
          %p753 = pneg %p311
        $region110: #{tpu_custom_call.1} parent=71 // pred_check_branch
          %755 = sbr.rel (%p753) target = $region112
        $region111: #{tpu_custom_call.1} parent=71 // pred_region
          %756 = dma.done %s749, 512
        $region112: #{tpu_custom_call.1} parent=71 // pred_fallthru
          _
        %s757 = sand.u32 %s44, 1
        %s758 = scalar_lea.sflag [#allocation18], %s757
        %s759 = sand.u32 %s324, 1
        %s760 = scalar_lea.vmem [#allocation19], %s759
        // Predicated region
        $region113: #{tpu_custom_call.1} parent=71 // pred_check
          %p761 = pneg %p337
        $region114: #{tpu_custom_call.1} parent=71 // pred_check_branch
          %763 = sbr.rel (%p761) target = $region116
        $region115: #{tpu_custom_call.1} parent=71 // pred_region
          %764 = dma.done %s758, 16
        $region116: #{tpu_custom_call.1} parent=71 // pred_fallthru
          _
        %s765 = sand.u32 %s44, 1
        %s766 = scalar_lea.sflag [#allocation21], %s765
        %s767 = sand.u32 %s350, 1
        %s768 = scalar_lea.vmem [#allocation20], %s767
        // Predicated region
        $region117: #{tpu_custom_call.1} parent=71 // pred_check
          %p769 = pneg %p363
        $region118: #{tpu_custom_call.1} parent=71 // pred_check_branch
          %771 = sbr.rel (%p769) target = $region120
        $region119: #{tpu_custom_call.1} parent=71 // pred_region
          %772 = dma.done %s766, 16
        $region120: #{tpu_custom_call.1} parent=71 // pred_fallthru
          _
        %s773 = sand.u32 %s44, 1
        %s774 = scalar_lea.sflag [#allocation21], %s773
        %s775 = sand.u32 %s376, 1
        %s776 = scalar_lea.vmem [#allocation22], %s775
        // Predicated region
        $region121: #{tpu_custom_call.1} parent=71 // pred_check
          %p777 = pneg %p389
        $region122: #{tpu_custom_call.1} parent=71 // pred_check_branch
          %779 = sbr.rel (%p777) target = $region124
        $region123: #{tpu_custom_call.1} parent=71 // pred_region
          %780 = dma.done %s774, 16
        $region124: #{tpu_custom_call.1} parent=71 // pred_fallthru
          _
        %p781 = pneg %p77
        %p782 = pneg %p74
        %s783 = sand.u32 %s44, 1
        %s784 = scalar_lea.sflag [#allocation6], %s783
        %s785 = sand.u32 %s90, 1
        %s786 = smul.addr %s785, 16
        %s787 = scalar_lea.vmem [#allocation5], %s786
        %p788 = pneg %p103
        %p789 = pneg %p100
        %s790 = sand.u32 %s44, 1
        %s791 = scalar_lea.sflag [#allocation6], %s790
        %s792 = sand.u32 %s116, 1
        %s793 = scalar_lea.vmem [#allocation7], %s792
        %p794 = pneg %p129
        %p795 = pneg %p126
        %s796 = sand.u32 %s44, 1
        %s797 = scalar_lea.sflag [#allocation9], %s796
        %s798 = sand.u32 %s142, 1
        %s799 = smul.addr %s798, 16
        %s800 = scalar_lea.vmem [#allocation8], %s799
        %p801 = pneg %p155
        %p802 = pneg %p152
        %s803 = sand.u32 %s44, 1
        %s804 = scalar_lea.sflag [#allocation9], %s803
        %s805 = sand.u32 %s168, 1
        %s806 = scalar_lea.vmem [#allocation10], %s805
        %p807 = pneg %p181
        %p808 = pneg %p178
        %s809 = sand.u32 %s44, 1
        %s810 = scalar_lea.sflag [#allocation12], %s809
        %s811 = sand.u32 %s194, 1
        %s812 = scalar_lea.vmem [#allocation11], %s811
        %p813 = pneg %p207
        %p814 = pneg %p204
        %s815 = sand.u32 %s44, 1
        %s816 = scalar_lea.sflag [#allocation12], %s815
        %s817 = sand.u32 %s220, 1
        %s818 = scalar_lea.vmem [#allocation13], %s817
        %p819 = pneg %p233
        %p820 = pneg %p230
        %s821 = sand.u32 %s44, 1
        %s822 = scalar_lea.sflag [#allocation15], %s821
        %s823 = sand.u32 %s246, 1
        %s824 = smul.addr %s823, 16
        %s825 = scalar_lea.vmem [#allocation14], %s824
        %p826 = pneg %p259
        %p827 = pneg %p256
        %s828 = sand.u32 %s44, 1
        %s829 = scalar_lea.sflag [#allocation15], %s828
        %s830 = sand.u32 %s272, 1
        %s831 = scalar_lea.vmem [#allocation16], %s830
        %p832 = pneg %p285
        %p833 = pneg %p282
        %s834 = sand.u32 %s44, 1
        %s835 = scalar_lea.sflag [#allocation18], %s834
        %s836 = sand.u32 %s298, 1
        %s837 = smul.addr %s836, 32
        %s838 = scalar_lea.vmem [#allocation17], %s837
        %p839 = pneg %p311
        %p840 = pneg %p308
        %s841 = sand.u32 %s44, 1
        %s842 = scalar_lea.sflag [#allocation18], %s841
        %s843 = sand.u32 %s324, 1
        %s844 = scalar_lea.vmem [#allocation19], %s843
        %p845 = pneg %p337
        %p846 = pneg %p334
        %s847 = sand.u32 %s44, 1
        %s848 = scalar_lea.sflag [#allocation21], %s847
        %s849 = sand.u32 %s350, 1
        %s850 = scalar_lea.vmem [#allocation20], %s849
        %p851 = pneg %p363
        %p852 = pneg %p360
        %s853 = sand.u32 %s44, 1
        %s854 = scalar_lea.sflag [#allocation21], %s853
        %s855 = sand.u32 %s376, 1
        %s856 = scalar_lea.vmem [#allocation22], %s855
        %p857 = pneg %p389
        %p858 = pneg %p386
        %p859 = pneg %p415
        %p860 = pneg %p412
        %s861 = smul.u32 2, %s48
        %s862 = smul.u32 2, %s48
        %p864 = scmp.eq.s32.totalorder %s49, 0
        // Predicated region
        $region125: #{tpu_custom_call.1} parent=71 // pred_check
          %p865 = pneg %p864
        $region126: #{tpu_custom_call.1} parent=71 // pred_check_branch
          %867 = sbr.rel (%p865) target = $region128
        $region127: #{tpu_custom_call.1} parent=71 // pred_region
          %v868 = vld [vmem:[#allocation2] sm:$0xf]
          %v869 = vld [vmem:[#allocation2 + $0x4] sm:$0xf]
          %vm870 = vcmask 257024
          %871 = vst.msk [vmem:[#allocation23] sm:$0xf] %vm870, %v868
          %872 = vst.msk [vmem:[#allocation23 + $0x4] sm:$0xf] %vm870, %v869
        $region128: #{tpu_custom_call.1} parent=71 // pred_fallthru
          _
        %v873 = vld [vmem:[#allocation23] sm:$0xf]
        %v874 = vld [vmem:[#allocation23 + $0x4] sm:$0xf]
        %v875 = vunpack.c.l.bf16 %v873
        %v876 = vunpack.c.l.bf16 %v874
        %v877 = vld [vmem:[%s685] sm:$0xf]
        %v878 = vld [vmem:[%s685 + $0x4] sm:$0xf]
        %v879 = vld [vmem:[%s685 + $0x8] sm:$0xf]
        %v880 = vld [vmem:[%s685 + $0xc] sm:$0xf]
        %v881 = vld [vmem:[%s693] sm:$0x1]
        %v883 = vlaneseq
        %v884 = vshrl.u32 %v883, 7
        %v885 = vsub.s32 0, %v884
        %v886 = vrot.slane %v881, %v885
        %v890 = vunpack.c.l.b16 %v873
        %v891 = vunpack.c.l.b16 %v874
        %v892 = vpack.c.b16 %v891, %v890
        %v897 = vunpack.c.l.b16 %v877
        %v898 = vunpack.c.l.b16 %v878
        %v899 = vunpack.c.l.b16 %v879
        %v900 = vunpack.c.l.b16 %v880
        %v901 = vpack.c.b16 %v898, %v897
        %v902 = vpack.c.b16 %v900, %v899
        %vm905 = vcmask 261120
        %v907 = vsel %vm905, %v892, 0
        %909 = vmatprep.subr.bf16.mxu0 0
        %910 = vmatpush1.bf16.msra.mxu0 %v901
        %911 = vmatprep.subr.bf16.mxu0 0
        %912 = vmatpush1.bf16.msra.mxu0 %v902
        %913 = vmatprep.subr.bf16.mxu0 0
        %914 = vmatpush1.bf16.msra.mxu0 0
        %915 = vmatprep.subr.bf16.mxu0 0
        %916 = vmatpush1.bf16.msra.mxu0 0
        %917 = vmatprep.subr.bf16.mxu0 0
        %918 = vmatpush1.bf16.msra.mxu0 0
        %919 = vmatprep.subr.bf16.mxu0 0
        %920 = vmatpush1.bf16.msra.mxu0 0
        %921 = vmatprep.subr.bf16.mxu0 0
        %922 = vmatpush1.bf16.msra.mxu0 0
        %923 = vmatprep.subr.bf16.mxu0 0
        %924 = vmatpush1.bf16.msra.mxu0 0
        %925 = vmatprep.subr.bf16.mxu0 0
        %926 = vmatpush1.bf16.msra.mxu0 0
        %927 = vmatprep.subr.bf16.mxu0 0
        %928 = vmatpush1.bf16.msra.mxu0 0
        %929 = vmatprep.subr.bf16.mxu0 0
        %930 = vmatpush1.bf16.msra.mxu0 0
        %931 = vmatprep.subr.bf16.mxu0 0
        %932 = vmatpush1.bf16.msra.mxu0 0
        %933 = vmatprep.subr.bf16.mxu0 0
        %934 = vmatpush1.bf16.msra.mxu0 0
        %935 = vmatprep.subr.bf16.mxu0 0
        %936 = vmatpush1.bf16.msra.mxu0 0
        %937 = vmatprep.subr.bf16.mxu0 0
        %938 = vmatpush1.bf16.msra.mxu0 0
        %939 = vmatprep.subr.bf16.mxu0 0
        %940 = vmatpush1.bf16.msra.mxu0 0
        %941 = vmatprep.mubr.bf16.mxu0 0
        %942 = vmatmul.mubr.bf16.gmra.mrb[0].mxu0 %v907
        %v943 = vpop.f32.mrb[0].mxu0
        %v944 = vadd.f32 %v886, %v943
        %v945 = vpop.f32.mrb[0].mxu0
        %v946 = vpop.f32.mrb[0].mxu0
        %v947 = vadd.f32 %v886, %v946
        %v948 = vpop.f32.mrb[0].mxu0
        %949 = vdwg.mxu0
        %v950 = vpack.c.bf16 %v944, %v944
        %v951 = vpack.c.bf16 %v947, %v947
        %953 = vrot.lane.b32.xlu0 %v950, 96
        %v954 = vpop.permute.xlu0 %953
        %vm955 = vcmask 64512
        %v957 = vsel %vm955, %v950, 0
        %v960 = vsel %vm955, %v954, 0
        %962 = vmatprep.subr.bf16.mxu0 0
        %963 = vmatpush1.bf16.xpose.msra.mxu0 %v960
        %964 = vmatprep.subr.bf16.mxu0 0
        %965 = vmatpush1.bf16.xpose.msra.mxu0 0
        %966 = vmatprep.subr.bf16.mxu0 0
        %967 = vmatpush1.bf16.xpose.msra.mxu0 0
        %968 = vmatprep.subr.bf16.mxu0 0
        %969 = vmatpush1.bf16.xpose.msra.mxu0 0
        %970 = vmatprep.subr.bf16.mxu0 0
        %971 = vmatpush1.bf16.xpose.msra.mxu0 0
        %972 = vmatprep.subr.bf16.mxu0 0
        %973 = vmatpush1.bf16.xpose.msra.mxu0 0
        %974 = vmatprep.subr.bf16.mxu0 0
        %975 = vmatpush1.bf16.xpose.msra.mxu0 0
        %976 = vmatprep.subr.bf16.mxu0 0
        %977 = vmatpush1.bf16.xpose.msra.mxu0 0
        %978 = vmatprep.subr.bf16.mxu0 0
        %979 = vmatpush1.bf16.xpose.msra.mxu0 0
        %980 = vmatprep.subr.bf16.mxu0 0
        %981 = vmatpush1.bf16.xpose.msra.mxu0 0
        %982 = vmatprep.subr.bf16.mxu0 0
        %983 = vmatpush1.bf16.xpose.msra.mxu0 0
        %984 = vmatprep.subr.bf16.mxu0 0
        %985 = vmatpush1.bf16.xpose.msra.mxu0 0
        %986 = vmatprep.subr.bf16.mxu0 0
        %987 = vmatpush1.bf16.xpose.msra.mxu0 0
        %988 = vmatprep.subr.bf16.mxu0 0
        %989 = vmatpush1.bf16.xpose.msra.mxu0 0
        %990 = vmatprep.subr.bf16.mxu0 0
        %991 = vmatpush1.bf16.xpose.msra.mxu0 0
        %992 = vmatprep.subr.bf16.mxu0 0
        %993 = vmatpush1.bf16.xpose.msra.mxu0 0
        %994 = vmatprep.mubr.bf16.mxu0 0
        %995 = vmatmul.mubr.bf16.gmra.mrb[0].mxu0 %v957
        %v996 = vpop.f32.mrb[0].mxu0
        %v997 = vadd.f32 0.0, %v996
        %v998 = vpop.f32.mrb[0].mxu0
        %v999 = vpop.f32.mrb[0].mxu0
        %v1000 = vpop.f32.mrb[0].mxu0
        %1001 = vdwg.mxu0
        %1003 = vrot.lane.b32.xlu0 %v951, 96
        %v1004 = vpop.permute.xlu0 %1003
        %v1006 = vsel %vm955, %v951, 0
        %v1009 = vsel %vm955, %v1004, 0
        %1011 = vmatprep.subr.bf16.mxu0 0
        %1012 = vmatpush1.bf16.xpose.msra.mxu0 %v1009
        %1013 = vmatprep.subr.bf16.mxu0 0
        %1014 = vmatpush1.bf16.xpose.msra.mxu0 0
        %1015 = vmatprep.subr.bf16.mxu0 0
        %1016 = vmatpush1.bf16.xpose.msra.mxu0 0
        %1017 = vmatprep.subr.bf16.mxu0 0
        %1018 = vmatpush1.bf16.xpose.msra.mxu0 0
        %1019 = vmatprep.subr.bf16.mxu0 0
        %1020 = vmatpush1.bf16.xpose.msra.mxu0 0
        %1021 = vmatprep.subr.bf16.mxu0 0
        %1022 = vmatpush1.bf16.xpose.msra.mxu0 0
        %1023 = vmatprep.subr.bf16.mxu0 0
        %1024 = vmatpush1.bf16.xpose.msra.mxu0 0
        %1025 = vmatprep.subr.bf16.mxu0 0
        %1026 = vmatpush1.bf16.xpose.msra.mxu0 0
        %1027 = vmatprep.subr.bf16.mxu0 0
        %1028 = vmatpush1.bf16.xpose.msra.mxu0 0
        %1029 = vmatprep.subr.bf16.mxu0 0
        %1030 = vmatpush1.bf16.xpose.msra.mxu0 0
        %1031 = vmatprep.subr.bf16.mxu0 0
        %1032 = vmatpush1.bf16.xpose.msra.mxu0 0
        %1033 = vmatprep.subr.bf16.mxu0 0
        %1034 = vmatpush1.bf16.xpose.msra.mxu0 0
        %1035 = vmatprep.subr.bf16.mxu0 0
        %1036 = vmatpush1.bf16.xpose.msra.mxu0 0
        %1037 = vmatprep.subr.bf16.mxu0 0
        %1038 = vmatpush1.bf16.xpose.msra.mxu0 0
        %1039 = vmatprep.subr.bf16.mxu0 0
        %1040 = vmatpush1.bf16.xpose.msra.mxu0 0
        %1041 = vmatprep.subr.bf16.mxu0 0
        %1042 = vmatpush1.bf16.xpose.msra.mxu0 0
        %1043 = vmatprep.mubr.bf16.mxu0 0
        %1044 = vmatmul.mubr.bf16.gmra.mrb[0].mxu0 %v1006
        %v1045 = vpop.f32.mrb[0].mxu0
        %v1046 = vadd.f32 0.0, %v1045
        %v1047 = vpop.f32.mrb[0].mxu0
        %v1048 = vpop.f32.mrb[0].mxu0
        %v1049 = vpop.f32.mrb[0].mxu0
        %1050 = vdwg.mxu0
        %v1051 = vmul.f32 %v997, 0.35355338
        %v1052 = vmul.f32 %v1046, 0.35355338
        %v1053 = vsel %vm955, %v1051, -inf
        %1054 = vmax.xlane.f32.xlu0 %v1053
        %v1055 = vpop.xlane.xlu0 %1054
        %v1056 = vsel %vm955, %v1052, -inf
        %1057 = vmax.xlane.f32.xlu0 %v1056
        %v1058 = vpop.xlane.xlu0 %1057
        %v1059 = vsub.f32 %v1051, %v1055
        %v1060 = vsub.f32 %v1052, %v1058
        %v1061 = vmul.f32 %v1059, 1.442695
        %v1062 = vpow.pop %v1061
        %v1063 = vmul.f32 %v1060, 1.442695
        %v1064 = vpow.pop %v1063
        %v1065 = vsel %vm955, %v1062, 0.0
        %1066 = vadd.xlane.f32.xlu0 %v1065
        %v1067 = vpop.xlane.xlu0 %1066
        %v1068 = vsel %vm955, %v1064, 0.0
        %1069 = vadd.xlane.f32.xlu0 %v1068
        %v1070 = vpop.xlane.xlu0 %1069
        %v1071 = vrcp.pop %v1067
        %v1072 = vrcp.pop %v1070
        %v1073 = vmul.f32 %v1067, %v1071
        %v1074 = vmul.f32 %v1070, %v1072
        %v1075 = vsub.f32 2.0, %v1073
        %v1076 = vsub.f32 2.0, %v1074
        %v1077 = vmul.f32 %v1071, %v1075
        %v1078 = vmul.f32 %v1072, %v1076
        %v1079 = vmul.f32 %v1062, %v1077
        %v1080 = vmul.f32 %v1064, %v1078
        %v1081 = vpack.c.bf16 %v1079, %v1079
        %v1082 = vpack.c.bf16 %v1080, %v1080
        %1083 = vrot.lane.b32.xlu0 %v950, 64
        %v1084 = vpop.permute.xlu0 %1083
        %v1086 = vsel %vm955, %v1081, 0
        %vm1088 = vcmask 1043456
        %v1090 = vsel %vm1088, %v1084, 0
        %1092 = vmatprep.subr.bf16.mxu0 0
        %1093 = vmatpush1.bf16.msra.mxu0 %v1090
        %1094 = vmatprep.subr.bf16.mxu0 0
        %1095 = vmatpush1.bf16.msra.mxu0 0
        %1096 = vmatprep.subr.bf16.mxu0 0
        %1097 = vmatpush1.bf16.msra.mxu0 0
        %1098 = vmatprep.subr.bf16.mxu0 0
        %1099 = vmatpush1.bf16.msra.mxu0 0
        %1100 = vmatprep.subr.bf16.mxu0 0
        %1101 = vmatpush1.bf16.msra.mxu0 0
        %1102 = vmatprep.subr.bf16.mxu0 0
        %1103 = vmatpush1.bf16.msra.mxu0 0
        %1104 = vmatprep.subr.bf16.mxu0 0
        %1105 = vmatpush1.bf16.msra.mxu0 0
        %1106 = vmatprep.subr.bf16.mxu0 0
        %1107 = vmatpush1.bf16.msra.mxu0 0
        %1108 = vmatprep.subr.bf16.mxu0 0
        %1109 = vmatpush1.bf16.msra.mxu0 0
        %1110 = vmatprep.subr.bf16.mxu0 0
        %1111 = vmatpush1.bf16.msra.mxu0 0
        %1112 = vmatprep.subr.bf16.mxu0 0
        %1113 = vmatpush1.bf16.msra.mxu0 0
        %1114 = vmatprep.subr.bf16.mxu0 0
        %1115 = vmatpush1.bf16.msra.mxu0 0
        %1116 = vmatprep.subr.bf16.mxu0 0
        %1117 = vmatpush1.bf16.msra.mxu0 0
        %1118 = vmatprep.subr.bf16.mxu0 0
        %1119 = vmatpush1.bf16.msra.mxu0 0
        %1120 = vmatprep.subr.bf16.mxu0 0
        %1121 = vmatpush1.bf16.msra.mxu0 0
        %1122 = vmatprep.subr.bf16.mxu0 0
        %1123 = vmatpush1.bf16.msra.mxu0 0
        %1124 = vmatprep.mubr.bf16.mxu0 0
        %1125 = vmatmul.mubr.bf16.gmra.mrb[0].mxu0 %v1086
        %v1126 = vpop.f32.mrb[0].mxu0
        %v1127 = vadd.f32 0.0, %v1126
        %v1128 = vpop.f32.mrb[0].mxu0
        %v1129 = vpop.f32.mrb[0].mxu0
        %v1130 = vpop.f32.mrb[0].mxu0
        %1131 = vdwg.mxu0
        %1132 = vrot.lane.b32.xlu0 %v951, 64
        %v1133 = vpop.permute.xlu0 %1132
        %v1135 = vsel %vm955, %v1082, 0
        %v1138 = vsel %vm1088, %v1133, 0
        %1140 = vmatprep.subr.bf16.mxu0 0
        %1141 = vmatpush1.bf16.msra.mxu0 %v1138
        %1142 = vmatprep.subr.bf16.mxu0 0
        %1143 = vmatpush1.bf16.msra.mxu0 0
        %1144 = vmatprep.subr.bf16.mxu0 0
        %1145 = vmatpush1.bf16.msra.mxu0 0
        %1146 = vmatprep.subr.bf16.mxu0 0
        %1147 = vmatpush1.bf16.msra.mxu0 0
        %1148 = vmatprep.subr.bf16.mxu0 0
        %1149 = vmatpush1.bf16.msra.mxu0 0
        %1150 = vmatprep.subr.bf16.mxu0 0
        %1151 = vmatpush1.bf16.msra.mxu0 0
        %1152 = vmatprep.subr.bf16.mxu0 0
        %1153 = vmatpush1.bf16.msra.mxu0 0
        %1154 = vmatprep.subr.bf16.mxu0 0
        %1155 = vmatpush1.bf16.msra.mxu0 0
        %1156 = vmatprep.subr.bf16.mxu0 0
        %1157 = vmatpush1.bf16.msra.mxu0 0
        %1158 = vmatprep.subr.bf16.mxu0 0
        %1159 = vmatpush1.bf16.msra.mxu0 0
        %1160 = vmatprep.subr.bf16.mxu0 0
        %1161 = vmatpush1.bf16.msra.mxu0 0
        %1162 = vmatprep.subr.bf16.mxu0 0
        %1163 = vmatpush1.bf16.msra.mxu0 0
        %1164 = vmatprep.subr.bf16.mxu0 0
        %1165 = vmatpush1.bf16.msra.mxu0 0
        %1166 = vmatprep.subr.bf16.mxu0 0
        %1167 = vmatpush1.bf16.msra.mxu0 0
        %1168 = vmatprep.subr.bf16.mxu0 0
        %1169 = vmatpush1.bf16.msra.mxu0 0
        %1170 = vmatprep.subr.bf16.mxu0 0
        %1171 = vmatpush1.bf16.msra.mxu0 0
        %1172 = vmatprep.mubr.bf16.mxu0 0
        %1173 = vmatmul.mubr.bf16.gmra.mrb[0].mxu0 %v1135
        %v1174 = vpop.f32.mrb[0].mxu0
        %v1175 = vadd.f32 0.0, %v1174
        %v1176 = vpop.f32.mrb[0].mxu0
        %v1177 = vpop.f32.mrb[0].mxu0
        %v1178 = vpop.f32.mrb[0].mxu0
        %1179 = vdwg.mxu0
        %1180 = vrot.lane.b32.xlu0 %v950, 120
        %v1181 = vpop.permute.xlu0 %1180
        %1182 = vrot.lane.b32.xlu0 %v950, 88
        %v1183 = vpop.permute.xlu0 %1182
        %v1185 = vsel %vm955, %v1181, 0
        %v1188 = vsel %vm955, %v1183, 0
        %1190 = vmatprep.subr.bf16.mxu0 0
        %1191 = vmatpush1.bf16.xpose.msra.mxu0 %v1188
        %1192 = vmatprep.subr.bf16.mxu0 0
        %1193 = vmatpush1.bf16.xpose.msra.mxu0 0
        %1194 = vmatprep.subr.bf16.mxu0 0
        %1195 = vmatpush1.bf16.xpose.msra.mxu0 0
        %1196 = vmatprep.subr.bf16.mxu0 0
        %1197 = vmatpush1.bf16.xpose.msra.mxu0 0
        %1198 = vmatprep.subr.bf16.mxu0 0
        %1199 = vmatpush1.bf16.xpose.msra.mxu0 0
        %1200 = vmatprep.subr.bf16.mxu0 0
        %1201 = vmatpush1.bf16.xpose.msra.mxu0 0
        %1202 = vmatprep.subr.bf16.mxu0 0
        %1203 = vmatpush1.bf16.xpose.msra.mxu0 0
        %1204 = vmatprep.subr.bf16.mxu0 0
        %1205 = vmatpush1.bf16.xpose.msra.mxu0 0
        %1206 = vmatprep.subr.bf16.mxu0 0
        %1207 = vmatpush1.bf16.xpose.msra.mxu0 0
        %1208 = vmatprep.subr.bf16.mxu0 0
        %1209 = vmatpush1.bf16.xpose.msra.mxu0 0
        %1210 = vmatprep.subr.bf16.mxu0 0
        %1211 = vmatpush1.bf16.xpose.msra.mxu0 0
        %1212 = vmatprep.subr.bf16.mxu0 0
        %1213 = vmatpush1.bf16.xpose.msra.mxu0 0
        %1214 = vmatprep.subr.bf16.mxu0 0
        %1215 = vmatpush1.bf16.xpose.msra.mxu0 0
        %1216 = vmatprep.subr.bf16.mxu0 0
        %1217 = vmatpush1.bf16.xpose.msra.mxu0 0
        %1218 = vmatprep.subr.bf16.mxu0 0
        %1219 = vmatpush1.bf16.xpose.msra.mxu0 0
        %1220 = vmatprep.subr.bf16.mxu0 0
        %1221 = vmatpush1.bf16.xpose.msra.mxu0 0
        %1222 = vmatprep.mubr.bf16.mxu0 0
        %1223 = vmatmul.mubr.bf16.gmra.mrb[0].mxu0 %v1185
        %v1224 = vpop.f32.mrb[0].mxu0
        %v1225 = vadd.f32 0.0, %v1224
        %v1226 = vpop.f32.mrb[0].mxu0
        %v1227 = vpop.f32.mrb[0].mxu0
        %v1228 = vpop.f32.mrb[0].mxu0
        %1229 = vdwg.mxu0
        %1230 = vrot.lane.b32.xlu0 %v951, 120
        %v1231 = vpop.permute.xlu0 %1230
        %1232 = vrot.lane.b32.xlu0 %v951, 88
        %v1233 = vpop.permute.xlu0 %1232
        %v1235 = vsel %vm955, %v1231, 0
        %v1238 = vsel %vm955, %v1233, 0
        %1240 = vmatprep.subr.bf16.mxu0 0
        %1241 = vmatpush1.bf16.xpose.msra.mxu0 %v1238
        %1242 = vmatprep.subr.bf16.mxu0 0
        %1243 = vmatpush1.bf16.xpose.msra.mxu0 0
        %1244 = vmatprep.subr.bf16.mxu0 0
        %1245 = vmatpush1.bf16.xpose.msra.mxu0 0
        %1246 = vmatprep.subr.bf16.mxu0 0
        %1247 = vmatpush1.bf16.xpose.msra.mxu0 0
        %1248 = vmatprep.subr.bf16.mxu0 0
        %1249 = vmatpush1.bf16.xpose.msra.mxu0 0
        %1250 = vmatprep.subr.bf16.mxu0 0
        %1251 = vmatpush1.bf16.xpose.msra.mxu0 0
        %1252 = vmatprep.subr.bf16.mxu0 0
        %1253 = vmatpush1.bf16.xpose.msra.mxu0 0
        %1254 = vmatprep.subr.bf16.mxu0 0
        %1255 = vmatpush1.bf16.xpose.msra.mxu0 0
        %1256 = vmatprep.subr.bf16.mxu0 0
        %1257 = vmatpush1.bf16.xpose.msra.mxu0 0
        %1258 = vmatprep.subr.bf16.mxu0 0
        %1259 = vmatpush1.bf16.xpose.msra.mxu0 0
        %1260 = vmatprep.subr.bf16.mxu0 0
        %1261 = vmatpush1.bf16.xpose.msra.mxu0 0
        %1262 = vmatprep.subr.bf16.mxu0 0
        %1263 = vmatpush1.bf16.xpose.msra.mxu0 0
        %1264 = vmatprep.subr.bf16.mxu0 0
        %1265 = vmatpush1.bf16.xpose.msra.mxu0 0
        %1266 = vmatprep.subr.bf16.mxu0 0
        %1267 = vmatpush1.bf16.xpose.msra.mxu0 0
        %1268 = vmatprep.subr.bf16.mxu0 0
        %1269 = vmatpush1.bf16.xpose.msra.mxu0 0
        %1270 = vmatprep.subr.bf16.mxu0 0
        %1271 = vmatpush1.bf16.xpose.msra.mxu0 0
        %1272 = vmatprep.mubr.bf16.mxu0 0
        %1273 = vmatmul.mubr.bf16.gmra.mrb[0].mxu0 %v1235
        %v1274 = vpop.f32.mrb[0].mxu0
        %v1275 = vadd.f32 0.0, %v1274
        %v1276 = vpop.f32.mrb[0].mxu0
        %v1277 = vpop.f32.mrb[0].mxu0
        %v1278 = vpop.f32.mrb[0].mxu0
        %1279 = vdwg.mxu0
        %v1280 = vmul.f32 %v1225, 0.35355338
        %v1281 = vmul.f32 %v1275, 0.35355338
        %v1282 = vsel %vm955, %v1280, -inf
        %1283 = vmax.xlane.f32.xlu0 %v1282
        %v1284 = vpop.xlane.xlu0 %1283
        %v1285 = vsel %vm955, %v1281, -inf
        %1286 = vmax.xlane.f32.xlu0 %v1285
        %v1287 = vpop.xlane.xlu0 %1286
        %v1288 = vsub.f32 %v1280, %v1284
        %v1289 = vsub.f32 %v1281, %v1287
        %v1290 = vmul.f32 %v1288, 1.442695
        %v1291 = vpow.pop %v1290
        %v1292 = vmul.f32 %v1289, 1.442695
        %v1293 = vpow.pop %v1292
        %v1294 = vsel %vm955, %v1291, 0.0
        %1295 = vadd.xlane.f32.xlu0 %v1294
        %v1296 = vpop.xlane.xlu0 %1295
        %v1297 = vsel %vm955, %v1293, 0.0
        %1298 = vadd.xlane.f32.xlu0 %v1297
        %v1299 = vpop.xlane.xlu0 %1298
        %v1300 = vrcp.pop %v1296
        %v1301 = vrcp.pop %v1299
        %v1302 = vmul.f32 %v1296, %v1300
        %v1303 = vmul.f32 %v1299, %v1301
        %v1304 = vsub.f32 2.0, %v1302
        %v1305 = vsub.f32 2.0, %v1303
        %v1306 = vmul.f32 %v1300, %v1304
        %v1307 = vmul.f32 %v1301, %v1305
        %v1308 = vmul.f32 %v1291, %v1306
        %v1309 = vmul.f32 %v1293, %v1307
        %v1310 = vpack.c.bf16 %v1308, %v1308
        %v1311 = vpack.c.bf16 %v1309, %v1309
        %1312 = vrot.lane.b32.xlu0 %v950, 56
        %v1313 = vpop.permute.xlu0 %1312
        %v1315 = vsel %vm955, %v1310, 0
        %v1318 = vsel %vm1088, %v1313, 0
        %1320 = vmatprep.subr.bf16.mxu0 0
        %1321 = vmatpush1.bf16.msra.mxu0 %v1318
        %1322 = vmatprep.subr.bf16.mxu0 0
        %1323 = vmatpush1.bf16.msra.mxu0 0
        %1324 = vmatprep.subr.bf16.mxu0 0
        %1325 = vmatpush1.bf16.msra.mxu0 0
        %1326 = vmatprep.subr.bf16.mxu0 0
        %1327 = vmatpush1.bf16.msra.mxu0 0
        %1328 = vmatprep.subr.bf16.mxu0 0
        %1329 = vmatpush1.bf16.msra.mxu0 0
        %1330 = vmatprep.subr.bf16.mxu0 0
        %1331 = vmatpush1.bf16.msra.mxu0 0
        %1332 = vmatprep.subr.bf16.mxu0 0
        %1333 = vmatpush1.bf16.msra.mxu0 0
        %1334 = vmatprep.subr.bf16.mxu0 0
        %1335 = vmatpush1.bf16.msra.mxu0 0
        %1336 = vmatprep.subr.bf16.mxu0 0
        %1337 = vmatpush1.bf16.msra.mxu0 0
        %1338 = vmatprep.subr.bf16.mxu0 0
        %1339 = vmatpush1.bf16.msra.mxu0 0
        %1340 = vmatprep.subr.bf16.mxu0 0
        %1341 = vmatpush1.bf16.msra.mxu0 0
        %1342 = vmatprep.subr.bf16.mxu0 0
        %1343 = vmatpush1.bf16.msra.mxu0 0
        %1344 = vmatprep.subr.bf16.mxu0 0
        %1345 = vmatpush1.bf16.msra.mxu0 0
        %1346 = vmatprep.subr.bf16.mxu0 0
        %1347 = vmatpush1.bf16.msra.mxu0 0
        %1348 = vmatprep.subr.bf16.mxu0 0
        %1349 = vmatpush1.bf16.msra.mxu0 0
        %1350 = vmatprep.subr.bf16.mxu0 0
        %1351 = vmatpush1.bf16.msra.mxu0 0
        %1352 = vmatprep.mubr.bf16.mxu0 0
        %1353 = vmatmul.mubr.bf16.gmra.mrb[0].mxu0 %v1315
        %v1354 = vpop.f32.mrb[0].mxu0
        %v1355 = vadd.f32 0.0, %v1354
        %v1356 = vpop.f32.mrb[0].mxu0
        %v1357 = vpop.f32.mrb[0].mxu0
        %v1358 = vpop.f32.mrb[0].mxu0
        %1359 = vdwg.mxu0
        %1360 = vrot.lane.b32.xlu0 %v951, 56
        %v1361 = vpop.permute.xlu0 %1360
        %v1363 = vsel %vm955, %v1311, 0
        %v1366 = vsel %vm1088, %v1361, 0
        %1368 = vmatprep.subr.bf16.mxu0 0
        %1369 = vmatpush1.bf16.msra.mxu0 %v1366
        %1370 = vmatprep.subr.bf16.mxu0 0
        %1371 = vmatpush1.bf16.msra.mxu0 0
        %1372 = vmatprep.subr.bf16.mxu0 0
        %1373 = vmatpush1.bf16.msra.mxu0 0
        %1374 = vmatprep.subr.bf16.mxu0 0
        %1375 = vmatpush1.bf16.msra.mxu0 0
        %1376 = vmatprep.subr.bf16.mxu0 0
        %1377 = vmatpush1.bf16.msra.mxu0 0
        %1378 = vmatprep.subr.bf16.mxu0 0
        %1379 = vmatpush1.bf16.msra.mxu0 0
        %1380 = vmatprep.subr.bf16.mxu0 0
        %1381 = vmatpush1.bf16.msra.mxu0 0
        %1382 = vmatprep.subr.bf16.mxu0 0
        %1383 = vmatpush1.bf16.msra.mxu0 0
        %1384 = vmatprep.subr.bf16.mxu0 0
        %1385 = vmatpush1.bf16.msra.mxu0 0
        %1386 = vmatprep.subr.bf16.mxu0 0
        %1387 = vmatpush1.bf16.msra.mxu0 0
        %1388 = vmatprep.subr.bf16.mxu0 0
        %1389 = vmatpush1.bf16.msra.mxu0 0
        %1390 = vmatprep.subr.bf16.mxu0 0
        %1391 = vmatpush1.bf16.msra.mxu0 0
        %1392 = vmatprep.subr.bf16.mxu0 0
        %1393 = vmatpush1.bf16.msra.mxu0 0
        %1394 = vmatprep.subr.bf16.mxu0 0
        %1395 = vmatpush1.bf16.msra.mxu0 0
        %1396 = vmatprep.subr.bf16.mxu0 0
        %1397 = vmatpush1.bf16.msra.mxu0 0
        %1398 = vmatprep.subr.bf16.mxu0 0
        %1399 = vmatpush1.bf16.msra.mxu0 0
        %1400 = vmatprep.mubr.bf16.mxu0 0
        %1401 = vmatmul.mubr.bf16.gmra.mrb[0].mxu0 %v1363
        %v1402 = vpop.f32.mrb[0].mxu0
        %v1403 = vadd.f32 0.0, %v1402
        %v1404 = vpop.f32.mrb[0].mxu0
        %v1405 = vpop.f32.mrb[0].mxu0
        %v1406 = vpop.f32.mrb[0].mxu0
        %1407 = vdwg.mxu0
        %1408 = vrot.lane.b32.xlu0 %v950, 112
        %v1409 = vpop.permute.xlu0 %1408
        %1410 = vrot.lane.b32.xlu0 %v950, 80
        %v1411 = vpop.permute.xlu0 %1410
        %v1413 = vsel %vm955, %v1409, 0
        %v1416 = vsel %vm955, %v1411, 0
        %1418 = vmatprep.subr.bf16.mxu0 0
        %1419 = vmatpush1.bf16.xpose.msra.mxu0 %v1416
        %1420 = vmatprep.subr.bf16.mxu0 0
        %1421 = vmatpush1.bf16.xpose.msra.mxu0 0
        %1422 = vmatprep.subr.bf16.mxu0 0
        %1423 = vmatpush1.bf16.xpose.msra.mxu0 0
        %1424 = vmatprep.subr.bf16.mxu0 0
        %1425 = vmatpush1.bf16.xpose.msra.mxu0 0
        %1426 = vmatprep.subr.bf16.mxu0 0
        %1427 = vmatpush1.bf16.xpose.msra.mxu0 0
        %1428 = vmatprep.subr.bf16.mxu0 0
        %1429 = vmatpush1.bf16.xpose.msra.mxu0 0
        %1430 = vmatprep.subr.bf16.mxu0 0
        %1431 = vmatpush1.bf16.xpose.msra.mxu0 0
        %1432 = vmatprep.subr.bf16.mxu0 0
        %1433 = vmatpush1.bf16.xpose.msra.mxu0 0
        %1434 = vmatprep.subr.bf16.mxu0 0
        %1435 = vmatpush1.bf16.xpose.msra.mxu0 0
        %1436 = vmatprep.subr.bf16.mxu0 0
        %1437 = vmatpush1.bf16.xpose.msra.mxu0 0
        %1438 = vmatprep.subr.bf16.mxu0 0
        %1439 = vmatpush1.bf16.xpose.msra.mxu0 0
        %1440 = vmatprep.subr.bf16.mxu0 0
        %1441 = vmatpush1.bf16.xpose.msra.mxu0 0
        %1442 = vmatprep.subr.bf16.mxu0 0
        %1443 = vmatpush1.bf16.xpose.msra.mxu0 0
        %1444 = vmatprep.subr.bf16.mxu0 0
        %1445 = vmatpush1.bf16.xpose.msra.mxu0 0
        %1446 = vmatprep.subr.bf16.mxu0 0
        %1447 = vmatpush1.bf16.xpose.msra.mxu0 0
        %1448 = vmatprep.subr.bf16.mxu0 0
        %1449 = vmatpush1.bf16.xpose.msra.mxu0 0
        %1450 = vmatprep.mubr.bf16.mxu0 0
        %1451 = vmatmul.mubr.bf16.gmra.mrb[0].mxu0 %v1413
        %v1452 = vpop.f32.mrb[0].mxu0
        %v1453 = vadd.f32 0.0, %v1452
        %v1454 = vpop.f32.mrb[0].mxu0
        %v1455 = vpop.f32.mrb[0].mxu0
        %v1456 = vpop.f32.mrb[0].mxu0
        %1457 = vdwg.mxu0
        %1458 = vrot.lane.b32.xlu0 %v951, 112
        %v1459 = vpop.permute.xlu0 %1458
        %1460 = vrot.lane.b32.xlu0 %v951, 80
        %v1461 = vpop.permute.xlu0 %1460
        %v1463 = vsel %vm955, %v1459, 0
        %v1466 = vsel %vm955, %v1461, 0
        %1468 = vmatprep.subr.bf16.mxu0 0
        %1469 = vmatpush1.bf16.xpose.msra.mxu0 %v1466
        %1470 = vmatprep.subr.bf16.mxu0 0
        %1471 = vmatpush1.bf16.xpose.msra.mxu0 0
        %1472 = vmatprep.subr.bf16.mxu0 0
        %1473 = vmatpush1.bf16.xpose.msra.mxu0 0
        %1474 = vmatprep.subr.bf16.mxu0 0
        %1475 = vmatpush1.bf16.xpose.msra.mxu0 0
        %1476 = vmatprep.subr.bf16.mxu0 0
        %1477 = vmatpush1.bf16.xpose.msra.mxu0 0
        %1478 = vmatprep.subr.bf16.mxu0 0
        %1479 = vmatpush1.bf16.xpose.msra.mxu0 0
        %1480 = vmatprep.subr.bf16.mxu0 0
        %1481 = vmatpush1.bf16.xpose.msra.mxu0 0
        %1482 = vmatprep.subr.bf16.mxu0 0
        %1483 = vmatpush1.bf16.xpose.msra.mxu0 0
        %1484 = vmatprep.subr.bf16.mxu0 0
        %1485 = vmatpush1.bf16.xpose.msra.mxu0 0
        %1486 = vmatprep.subr.bf16.mxu0 0
        %1487 = vmatpush1.bf16.xpose.msra.mxu0 0
        %1488 = vmatprep.subr.bf16.mxu0 0
        %1489 = vmatpush1.bf16.xpose.msra.mxu0 0
        %1490 = vmatprep.subr.bf16.mxu0 0
        %1491 = vmatpush1.bf16.xpose.msra.mxu0 0
        %1492 = vmatprep.subr.bf16.mxu0 0
        %1493 = vmatpush1.bf16.xpose.msra.mxu0 0
        %1494 = vmatprep.subr.bf16.mxu0 0
        %1495 = vmatpush1.bf16.xpose.msra.mxu0 0
        %1496 = vmatprep.subr.bf16.mxu0 0
        %1497 = vmatpush1.bf16.xpose.msra.mxu0 0
        %1498 = vmatprep.subr.bf16.mxu0 0
        %1499 = vmatpush1.bf16.xpose.msra.mxu0 0
        %1500 = vmatprep.mubr.bf16.mxu0 0
        %1501 = vmatmul.mubr.bf16.gmra.mrb[0].mxu0 %v1463
        %v1502 = vpop.f32.mrb[0].mxu0
        %v1503 = vadd.f32 0.0, %v1502
        %v1504 = vpop.f32.mrb[0].mxu0
        %v1505 = vpop.f32.mrb[0].mxu0
        %v1506 = vpop.f32.mrb[0].mxu0
        %1507 = vdwg.mxu0
        %v1508 = vmul.f32 %v1453, 0.35355338
        %v1509 = vmul.f32 %v1503, 0.35355338
        %v1510 = vsel %vm955, %v1508, -inf
        %1511 = vmax.xlane.f32.xlu0 %v1510
        %v1512 = vpop.xlane.xlu0 %1511
        %v1513 = vsel %vm955, %v1509, -inf
        %1514 = vmax.xlane.f32.xlu0 %v1513
        %v1515 = vpop.xlane.xlu0 %1514
        %v1516 = vsub.f32 %v1508, %v1512
        %v1517 = vsub.f32 %v1509, %v1515
        %v1518 = vmul.f32 %v1516, 1.442695
        %v1519 = vpow.pop %v1518
        %v1520 = vmul.f32 %v1517, 1.442695
        %v1521 = vpow.pop %v1520
        %v1522 = vsel %vm955, %v1519, 0.0
        %1523 = vadd.xlane.f32.xlu0 %v1522
        %v1524 = vpop.xlane.xlu0 %1523
        %v1525 = vsel %vm955, %v1521, 0.0
        %1526 = vadd.xlane.f32.xlu0 %v1525
        %v1527 = vpop.xlane.xlu0 %1526
        %v1528 = vrcp.pop %v1524
        %v1529 = vrcp.pop %v1527
        %v1530 = vmul.f32 %v1524, %v1528
        %v1531 = vmul.f32 %v1527, %v1529
        %v1532 = vsub.f32 2.0, %v1530
        %v1533 = vsub.f32 2.0, %v1531
        %v1534 = vmul.f32 %v1528, %v1532
        %v1535 = vmul.f32 %v1529, %v1533
        %v1536 = vmul.f32 %v1519, %v1534
        %v1537 = vmul.f32 %v1521, %v1535
        %v1538 = vpack.c.bf16 %v1536, %v1536
        %v1539 = vpack.c.bf16 %v1537, %v1537
        %1540 = vrot.lane.b32.xlu0 %v950, 48
        %v1541 = vpop.permute.xlu0 %1540
        %v1543 = vsel %vm955, %v1538, 0
        %v1546 = vsel %vm1088, %v1541, 0
        %1548 = vmatprep.subr.bf16.mxu0 0
        %1549 = vmatpush1.bf16.msra.mxu0 %v1546
        %1550 = vmatprep.subr.bf16.mxu0 0
        %1551 = vmatpush1.bf16.msra.mxu0 0
        %1552 = vmatprep.subr.bf16.mxu0 0
        %1553 = vmatpush1.bf16.msra.mxu0 0
        %1554 = vmatprep.subr.bf16.mxu0 0
        %1555 = vmatpush1.bf16.msra.mxu0 0
        %1556 = vmatprep.subr.bf16.mxu0 0
        %1557 = vmatpush1.bf16.msra.mxu0 0
        %1558 = vmatprep.subr.bf16.mxu0 0
        %1559 = vmatpush1.bf16.msra.mxu0 0
        %1560 = vmatprep.subr.bf16.mxu0 0
        %1561 = vmatpush1.bf16.msra.mxu0 0
        %1562 = vmatprep.subr.bf16.mxu0 0
        %1563 = vmatpush1.bf16.msra.mxu0 0
        %1564 = vmatprep.subr.bf16.mxu0 0
        %1565 = vmatpush1.bf16.msra.mxu0 0
        %1566 = vmatprep.subr.bf16.mxu0 0
        %1567 = vmatpush1.bf16.msra.mxu0 0
        %1568 = vmatprep.subr.bf16.mxu0 0
        %1569 = vmatpush1.bf16.msra.mxu0 0
        %1570 = vmatprep.subr.bf16.mxu0 0
        %1571 = vmatpush1.bf16.msra.mxu0 0
        %1572 = vmatprep.subr.bf16.mxu0 0
        %1573 = vmatpush1.bf16.msra.mxu0 0
        %1574 = vmatprep.subr.bf16.mxu0 0
        %1575 = vmatpush1.bf16.msra.mxu0 0
        %1576 = vmatprep.subr.bf16.mxu0 0
        %1577 = vmatpush1.bf16.msra.mxu0 0
        %1578 = vmatprep.subr.bf16.mxu0 0
        %1579 = vmatpush1.bf16.msra.mxu0 0
        %1580 = vmatprep.mubr.bf16.mxu0 0
        %1581 = vmatmul.mubr.bf16.gmra.mrb[0].mxu0 %v1543
        %v1582 = vpop.f32.mrb[0].mxu0
        %v1583 = vadd.f32 0.0, %v1582
        %v1584 = vpop.f32.mrb[0].mxu0
        %v1585 = vpop.f32.mrb[0].mxu0
        %v1586 = vpop.f32.mrb[0].mxu0
        %1587 = vdwg.mxu0
        %1588 = vrot.lane.b32.xlu0 %v951, 48
        %v1589 = vpop.permute.xlu0 %1588
        %v1591 = vsel %vm955, %v1539, 0
        %v1594 = vsel %vm1088, %v1589, 0
        %1596 = vmatprep.subr.bf16.mxu0 0
        %1597 = vmatpush1.bf16.msra.mxu0 %v1594
        %1598 = vmatprep.subr.bf16.mxu0 0
        %1599 = vmatpush1.bf16.msra.mxu0 0
        %1600 = vmatprep.subr.bf16.mxu0 0
        %1601 = vmatpush1.bf16.msra.mxu0 0
        %1602 = vmatprep.subr.bf16.mxu0 0
        %1603 = vmatpush1.bf16.msra.mxu0 0
        %1604 = vmatprep.subr.bf16.mxu0 0
        %1605 = vmatpush1.bf16.msra.mxu0 0
        %1606 = vmatprep.subr.bf16.mxu0 0
        %1607 = vmatpush1.bf16.msra.mxu0 0
        %1608 = vmatprep.subr.bf16.mxu0 0
        %1609 = vmatpush1.bf16.msra.mxu0 0
        %1610 = vmatprep.subr.bf16.mxu0 0
        %1611 = vmatpush1.bf16.msra.mxu0 0
        %1612 = vmatprep.subr.bf16.mxu0 0
        %1613 = vmatpush1.bf16.msra.mxu0 0
        %1614 = vmatprep.subr.bf16.mxu0 0
        %1615 = vmatpush1.bf16.msra.mxu0 0
        %1616 = vmatprep.subr.bf16.mxu0 0
        %1617 = vmatpush1.bf16.msra.mxu0 0
        %1618 = vmatprep.subr.bf16.mxu0 0
        %1619 = vmatpush1.bf16.msra.mxu0 0
        %1620 = vmatprep.subr.bf16.mxu0 0
        %1621 = vmatpush1.bf16.msra.mxu0 0
        %1622 = vmatprep.subr.bf16.mxu0 0
        %1623 = vmatpush1.bf16.msra.mxu0 0
        %1624 = vmatprep.subr.bf16.mxu0 0
        %1625 = vmatpush1.bf16.msra.mxu0 0
        %1626 = vmatprep.subr.bf16.mxu0 0
        %1627 = vmatpush1.bf16.msra.mxu0 0
        %1628 = vmatprep.mubr.bf16.mxu0 0
        %1629 = vmatmul.mubr.bf16.gmra.mrb[0].mxu0 %v1591
        %v1630 = vpop.f32.mrb[0].mxu0
        %v1631 = vadd.f32 0.0, %v1630
        %v1632 = vpop.f32.mrb[0].mxu0
        %v1633 = vpop.f32.mrb[0].mxu0
        %v1634 = vpop.f32.mrb[0].mxu0
        %1635 = vdwg.mxu0
        %1636 = vrot.lane.b32.xlu0 %v950, 104
        %v1637 = vpop.permute.xlu0 %1636
        %1638 = vrot.lane.b32.xlu0 %v950, 72
        %v1639 = vpop.permute.xlu0 %1638
        %v1641 = vsel %vm955, %v1637, 0
        %v1644 = vsel %vm955, %v1639, 0
        %1646 = vmatprep.subr.bf16.mxu0 0
        %1647 = vmatpush1.bf16.xpose.msra.mxu0 %v1644
        %1648 = vmatprep.subr.bf16.mxu0 0
        %1649 = vmatpush1.bf16.xpose.msra.mxu0 0
        %1650 = vmatprep.subr.bf16.mxu0 0
        %1651 = vmatpush1.bf16.xpose.msra.mxu0 0
        %1652 = vmatprep.subr.bf16.mxu0 0
        %1653 = vmatpush1.bf16.xpose.msra.mxu0 0
        %1654 = vmatprep.subr.bf16.mxu0 0
        %1655 = vmatpush1.bf16.xpose.msra.mxu0 0
        %1656 = vmatprep.subr.bf16.mxu0 0
        %1657 = vmatpush1.bf16.xpose.msra.mxu0 0
        %1658 = vmatprep.subr.bf16.mxu0 0
        %1659 = vmatpush1.bf16.xpose.msra.mxu0 0
        %1660 = vmatprep.subr.bf16.mxu0 0
        %1661 = vmatpush1.bf16.xpose.msra.mxu0 0
        %1662 = vmatprep.subr.bf16.mxu0 0
        %1663 = vmatpush1.bf16.xpose.msra.mxu0 0
        %1664 = vmatprep.subr.bf16.mxu0 0
        %1665 = vmatpush1.bf16.xpose.msra.mxu0 0
        %1666 = vmatprep.subr.bf16.mxu0 0
        %1667 = vmatpush1.bf16.xpose.msra.mxu0 0
        %1668 = vmatprep.subr.bf16.mxu0 0
        %1669 = vmatpush1.bf16.xpose.msra.mxu0 0
        %1670 = vmatprep.subr.bf16.mxu0 0
        %1671 = vmatpush1.bf16.xpose.msra.mxu0 0
        %1672 = vmatprep.subr.bf16.mxu0 0
        %1673 = vmatpush1.bf16.xpose.msra.mxu0 0
        %1674 = vmatprep.subr.bf16.mxu0 0
        %1675 = vmatpush1.bf16.xpose.msra.mxu0 0
        %1676 = vmatprep.subr.bf16.mxu0 0
        %1677 = vmatpush1.bf16.xpose.msra.mxu0 0
        %1678 = vmatprep.mubr.bf16.mxu0 0
        %1679 = vmatmul.mubr.bf16.gmra.mrb[0].mxu0 %v1641
        %v1680 = vpop.f32.mrb[0].mxu0
        %v1681 = vadd.f32 0.0, %v1680
        %v1682 = vpop.f32.mrb[0].mxu0
        %v1683 = vpop.f32.mrb[0].mxu0
        %v1684 = vpop.f32.mrb[0].mxu0
        %1685 = vdwg.mxu0
        %1686 = vrot.lane.b32.xlu0 %v951, 104
        %v1687 = vpop.permute.xlu0 %1686
        %1688 = vrot.lane.b32.xlu0 %v951, 72
        %v1689 = vpop.permute.xlu0 %1688
        %v1691 = vsel %vm955, %v1687, 0
        %v1694 = vsel %vm955, %v1689, 0
        %1696 = vmatprep.subr.bf16.mxu0 0
        %1697 = vmatpush1.bf16.xpose.msra.mxu0 %v1694
        %1698 = vmatprep.subr.bf16.mxu0 0
        %1699 = vmatpush1.bf16.xpose.msra.mxu0 0
        %1700 = vmatprep.subr.bf16.mxu0 0
        %1701 = vmatpush1.bf16.xpose.msra.mxu0 0
        %1702 = vmatprep.subr.bf16.mxu0 0
        %1703 = vmatpush1.bf16.xpose.msra.mxu0 0
        %1704 = vmatprep.subr.bf16.mxu0 0
        %1705 = vmatpush1.bf16.xpose.msra.mxu0 0
        %1706 = vmatprep.subr.bf16.mxu0 0
        %1707 = vmatpush1.bf16.xpose.msra.mxu0 0
        %1708 = vmatprep.subr.bf16.mxu0 0
        %1709 = vmatpush1.bf16.xpose.msra.mxu0 0
        %1710 = vmatprep.subr.bf16.mxu0 0
        %1711 = vmatpush1.bf16.xpose.msra.mxu0 0
        %1712 = vmatprep.subr.bf16.mxu0 0
        %1713 = vmatpush1.bf16.xpose.msra.mxu0 0
        %1714 = vmatprep.subr.bf16.mxu0 0
        %1715 = vmatpush1.bf16.xpose.msra.mxu0 0
        %1716 = vmatprep.subr.bf16.mxu0 0
        %1717 = vmatpush1.bf16.xpose.msra.mxu0 0
        %1718 = vmatprep.subr.bf16.mxu0 0
        %1719 = vmatpush1.bf16.xpose.msra.mxu0 0
        %1720 = vmatprep.subr.bf16.mxu0 0
        %1721 = vmatpush1.bf16.xpose.msra.mxu0 0
        %1722 = vmatprep.subr.bf16.mxu0 0
        %1723 = vmatpush1.bf16.xpose.msra.mxu0 0
        %1724 = vmatprep.subr.bf16.mxu0 0
        %1725 = vmatpush1.bf16.xpose.msra.mxu0 0
        %1726 = vmatprep.subr.bf16.mxu0 0
        %1727 = vmatpush1.bf16.xpose.msra.mxu0 0
        %1728 = vmatprep.mubr.bf16.mxu0 0
        %1729 = vmatmul.mubr.bf16.gmra.mrb[0].mxu0 %v1691
        %v1730 = vpop.f32.mrb[0].mxu0
        %v1731 = vadd.f32 0.0, %v1730
        %v1732 = vpop.f32.mrb[0].mxu0
        %v1733 = vpop.f32.mrb[0].mxu0
        %v1734 = vpop.f32.mrb[0].mxu0
        %1735 = vdwg.mxu0
        %v1736 = vmul.f32 %v1681, 0.35355338
        %v1737 = vmul.f32 %v1731, 0.35355338
        %v1738 = vsel %vm955, %v1736, -inf
        %1739 = vmax.xlane.f32.xlu0 %v1738
        %v1740 = vpop.xlane.xlu0 %1739
        %v1741 = vsel %vm955, %v1737, -inf
        %1742 = vmax.xlane.f32.xlu0 %v1741
        %v1743 = vpop.xlane.xlu0 %1742
        %v1744 = vsub.f32 %v1736, %v1740
        %v1745 = vsub.f32 %v1737, %v1743
        %v1746 = vmul.f32 %v1744, 1.442695
        %v1747 = vpow.pop %v1746
        %v1748 = vmul.f32 %v1745, 1.442695
        %v1749 = vpow.pop %v1748
        %v1750 = vsel %vm955, %v1747, 0.0
        %1751 = vadd.xlane.f32.xlu0 %v1750
        %v1752 = vpop.xlane.xlu0 %1751
        %v1753 = vsel %vm955, %v1749, 0.0
        %1754 = vadd.xlane.f32.xlu0 %v1753
        %v1755 = vpop.xlane.xlu0 %1754
        %v1756 = vrcp.pop %v1752
        %v1757 = vrcp.pop %v1755
        %v1758 = vmul.f32 %v1752, %v1756
        %v1759 = vmul.f32 %v1755, %v1757
        %v1760 = vsub.f32 2.0, %v1758
        %v1761 = vsub.f32 2.0, %v1759
        %v1762 = vmul.f32 %v1756, %v1760
        %v1763 = vmul.f32 %v1757, %v1761
        %v1764 = vmul.f32 %v1747, %v1762
        %v1765 = vmul.f32 %v1749, %v1763
        %v1766 = vpack.c.bf16 %v1764, %v1764
        %v1767 = vpack.c.bf16 %v1765, %v1765
        %1768 = vrot.lane.b32.xlu0 %v950, 40
        %v1769 = vpop.permute.xlu0 %1768
        %v1771 = vsel %vm955, %v1766, 0
        %v1774 = vsel %vm1088, %v1769, 0
        %1776 = vmatprep.subr.bf16.mxu0 0
        %1777 = vmatpush1.bf16.msra.mxu0 %v1774
        %1778 = vmatprep.subr.bf16.mxu0 0
        %1779 = vmatpush1.bf16.msra.mxu0 0
        %1780 = vmatprep.subr.bf16.mxu0 0
        %1781 = vmatpush1.bf16.msra.mxu0 0
        %1782 = vmatprep.subr.bf16.mxu0 0
        %1783 = vmatpush1.bf16.msra.mxu0 0
        %1784 = vmatprep.subr.bf16.mxu0 0
        %1785 = vmatpush1.bf16.msra.mxu0 0
        %1786 = vmatprep.subr.bf16.mxu0 0
        %1787 = vmatpush1.bf16.msra.mxu0 0
        %1788 = vmatprep.subr.bf16.mxu0 0
        %1789 = vmatpush1.bf16.msra.mxu0 0
        %1790 = vmatprep.subr.bf16.mxu0 0
        %1791 = vmatpush1.bf16.msra.mxu0 0
        %1792 = vmatprep.subr.bf16.mxu0 0
        %1793 = vmatpush1.bf16.msra.mxu0 0
        %1794 = vmatprep.subr.bf16.mxu0 0
        %1795 = vmatpush1.bf16.msra.mxu0 0
        %1796 = vmatprep.subr.bf16.mxu0 0
        %1797 = vmatpush1.bf16.msra.mxu0 0
        %1798 = vmatprep.subr.bf16.mxu0 0
        %1799 = vmatpush1.bf16.msra.mxu0 0
        %1800 = vmatprep.subr.bf16.mxu0 0
        %1801 = vmatpush1.bf16.msra.mxu0 0
        %1802 = vmatprep.subr.bf16.mxu0 0
        %1803 = vmatpush1.bf16.msra.mxu0 0
        %1804 = vmatprep.subr.bf16.mxu0 0
        %1805 = vmatpush1.bf16.msra.mxu0 0
        %1806 = vmatprep.subr.bf16.mxu0 0
        %1807 = vmatpush1.bf16.msra.mxu0 0
        %1808 = vmatprep.mubr.bf16.mxu0 0
        %1809 = vmatmul.mubr.bf16.gmra.mrb[0].mxu0 %v1771
        %v1810 = vpop.f32.mrb[0].mxu0
        %v1811 = vadd.f32 0.0, %v1810
        %v1812 = vpop.f32.mrb[0].mxu0
        %v1813 = vpop.f32.mrb[0].mxu0
        %v1814 = vpop.f32.mrb[0].mxu0
        %1815 = vdwg.mxu0
        %1816 = vrot.lane.b32.xlu0 %v951, 40
        %v1817 = vpop.permute.xlu0 %1816
        %v1819 = vsel %vm955, %v1767, 0
        %v1822 = vsel %vm1088, %v1817, 0
        %1824 = vmatprep.subr.bf16.mxu0 0
        %1825 = vmatpush1.bf16.msra.mxu0 %v1822
        %1826 = vmatprep.subr.bf16.mxu0 0
        %1827 = vmatpush1.bf16.msra.mxu0 0
        %1828 = vmatprep.subr.bf16.mxu0 0
        %1829 = vmatpush1.bf16.msra.mxu0 0
        %1830 = vmatprep.subr.bf16.mxu0 0
        %1831 = vmatpush1.bf16.msra.mxu0 0
        %1832 = vmatprep.subr.bf16.mxu0 0
        %1833 = vmatpush1.bf16.msra.mxu0 0
        %1834 = vmatprep.subr.bf16.mxu0 0
        %1835 = vmatpush1.bf16.msra.mxu0 0
        %1836 = vmatprep.subr.bf16.mxu0 0
        %1837 = vmatpush1.bf16.msra.mxu0 0
        %1838 = vmatprep.subr.bf16.mxu0 0
        %1839 = vmatpush1.bf16.msra.mxu0 0
        %1840 = vmatprep.subr.bf16.mxu0 0
        %1841 = vmatpush1.bf16.msra.mxu0 0
        %1842 = vmatprep.subr.bf16.mxu0 0
        %1843 = vmatpush1.bf16.msra.mxu0 0
        %1844 = vmatprep.subr.bf16.mxu0 0
        %1845 = vmatpush1.bf16.msra.mxu0 0
        %1846 = vmatprep.subr.bf16.mxu0 0
        %1847 = vmatpush1.bf16.msra.mxu0 0
        %1848 = vmatprep.subr.bf16.mxu0 0
        %1849 = vmatpush1.bf16.msra.mxu0 0
        %1850 = vmatprep.subr.bf16.mxu0 0
        %1851 = vmatpush1.bf16.msra.mxu0 0
        %1852 = vmatprep.subr.bf16.mxu0 0
        %1853 = vmatpush1.bf16.msra.mxu0 0
        %1854 = vmatprep.subr.bf16.mxu0 0
        %1855 = vmatpush1.bf16.msra.mxu0 0
        %1856 = vmatprep.mubr.bf16.mxu0 0
        %1857 = vmatmul.mubr.bf16.gmra.mrb[0].mxu0 %v1819
        %v1858 = vpop.f32.mrb[0].mxu0
        %v1859 = vadd.f32 0.0, %v1858
        %v1860 = vpop.f32.mrb[0].mxu0
        %v1861 = vpop.f32.mrb[0].mxu0
        %v1862 = vpop.f32.mrb[0].mxu0
        %1863 = vdwg.mxu0
        %1866 = vrot.lane.b32.xlu0 %v1355, 8
        %v1867 = vpop.permute.xlu0 %1866
        %1868 = vrot.lane.b32.xlu0 %v1403, 8
        %v1869 = vpop.permute.xlu0 %1868
        %1874 = vrot.lane.b32.xlu0 %v1583, 16
        %v1875 = vpop.permute.xlu0 %1874
        %1876 = vrot.lane.b32.xlu0 %v1631, 16
        %v1877 = vpop.permute.xlu0 %1876
        %1882 = vrot.lane.b32.xlu0 %v1811, 24
        %v1883 = vpop.permute.xlu0 %1882
        %1884 = vrot.lane.b32.xlu0 %v1859, 24
        %v1885 = vpop.permute.xlu0 %1884
        %v1888 = vsel %vm955, %v1127, %v1867
        %v1889 = vsel %vm955, %v1175, %v1869
        %vm1890 = vcmask 130048
        %v1891 = vsel %vm1890, %v1888, %v1875
        %v1892 = vsel %vm1890, %v1889, %v1877
        %vm1893 = vcmask 195584
        %v1894 = vsel %vm1893, %v1891, %v1883
        %v1895 = vsel %vm1893, %v1892, %v1885
        %v1896 = vpack.c.bf16 %v1895, %v1894
        %v1897 = vld [vmem:[%s702] sm:$0xf]
        %v1898 = vld [vmem:[%s702 + $0x4] sm:$0xf]
        %v1899 = vld [vmem:[%s702 + $0x8] sm:$0xf]
        %v1900 = vld [vmem:[%s702 + $0xc] sm:$0xf]
        %v1901 = vld [vmem:[%s710] sm:$0x1]
        %v1903 = vlaneseq
        %v1904 = vshrl.u32 %v1903, 7
        %v1905 = vsub.s32 0, %v1904
        %v1906 = vrot.slane %v1901, %v1905
        %v1912 = vunpack.c.l.b16 %v1897
        %v1913 = vunpack.c.l.b16 %v1898
        %v1914 = vunpack.c.l.b16 %v1899
        %v1915 = vunpack.c.l.b16 %v1900
        %v1916 = vpack.c.b16 %v1913, %v1912
        %v1917 = vpack.c.b16 %v1915, %v1914
        %v1921 = vsel %vm905, %v1896, 0
        %1923 = vmatprep.subr.bf16.mxu0 0
        %1924 = vmatpush1.bf16.msra.mxu0 %v1916
        %1925 = vmatprep.subr.bf16.mxu0 0
        %1926 = vmatpush1.bf16.msra.mxu0 %v1917
        %1927 = vmatprep.subr.bf16.mxu0 0
        %1928 = vmatpush1.bf16.msra.mxu0 0
        %1929 = vmatprep.subr.bf16.mxu0 0
        %1930 = vmatpush1.bf16.msra.mxu0 0
        %1931 = vmatprep.subr.bf16.mxu0 0
        %1932 = vmatpush1.bf16.msra.mxu0 0
        %1933 = vmatprep.subr.bf16.mxu0 0
        %1934 = vmatpush1.bf16.msra.mxu0 0
        %1935 = vmatprep.subr.bf16.mxu0 0
        %1936 = vmatpush1.bf16.msra.mxu0 0
        %1937 = vmatprep.subr.bf16.mxu0 0
        %1938 = vmatpush1.bf16.msra.mxu0 0
        %1939 = vmatprep.subr.bf16.mxu0 0
        %1940 = vmatpush1.bf16.msra.mxu0 0
        %1941 = vmatprep.subr.bf16.mxu0 0
        %1942 = vmatpush1.bf16.msra.mxu0 0
        %1943 = vmatprep.subr.bf16.mxu0 0
        %1944 = vmatpush1.bf16.msra.mxu0 0
        %1945 = vmatprep.subr.bf16.mxu0 0
        %1946 = vmatpush1.bf16.msra.mxu0 0
        %1947 = vmatprep.subr.bf16.mxu0 0
        %1948 = vmatpush1.bf16.msra.mxu0 0
        %1949 = vmatprep.subr.bf16.mxu0 0
        %1950 = vmatpush1.bf16.msra.mxu0 0
        %1951 = vmatprep.subr.bf16.mxu0 0
        %1952 = vmatpush1.bf16.msra.mxu0 0
        %1953 = vmatprep.subr.bf16.mxu0 0
        %1954 = vmatpush1.bf16.msra.mxu0 0
        %1955 = vmatprep.mubr.bf16.mxu0 0
        %1956 = vmatmul.mubr.bf16.gmra.mrb[0].mxu0 %v1921
        %v1957 = vpop.f32.mrb[0].mxu0
        %v1958 = vadd.f32 %v1906, %v1957
        %v1959 = vpop.f32.mrb[0].mxu0
        %v1960 = vpop.f32.mrb[0].mxu0
        %v1961 = vadd.f32 %v1906, %v1960
        %v1962 = vpop.f32.mrb[0].mxu0
        %1963 = vdwg.mxu0
        %v1964 = vadd.f32 %v875, %v1958
        %v1965 = vadd.f32 %v876, %v1961
        %v1966 = vld [vmem:[%s718] sm:$0x1]
        %v1967 = vld [vmem:[%s726] sm:$0x1]
        %v1968 = vsel %vm905, %v1964, 0.0
        %1969 = vadd.xlane.f32.xlu0 %v1968
        %v1970 = vpop.xlane.xlu0 %1969
        %v1971 = vsel %vm905, %v1965, 0.0
        %1972 = vadd.xlane.f32.xlu0 %v1971
        %v1973 = vpop.xlane.xlu0 %1972
        %v1974 = vrcp.pop 32.0
        %v1975 = vmul.f32 %v1970, %v1974
        %v1976 = vmul.f32 %v1973, %v1974
        %v1977 = vsub.f32 %v1964, %v1975
        %v1978 = vsub.f32 %v1965, %v1976
        %v1979 = vmul.f32 %v1977, %v1977
        %v1980 = vmul.f32 %v1978, %v1978
        %v1981 = vsel %vm905, %v1979, 0.0
        %1982 = vadd.xlane.f32.xlu0 %v1981
        %v1983 = vpop.xlane.xlu0 %1982
        %v1984 = vsel %vm905, %v1980, 0.0
        %1985 = vadd.xlane.f32.xlu0 %v1984
        %v1986 = vpop.xlane.xlu0 %1985
        %v1987 = vmul.f32 %v1983, %v1974
        %v1988 = vmul.f32 %v1986, %v1974
        %v1989 = vadd.f32 %v1987, 1e-05
        %v1990 = vadd.f32 %v1988, 1e-05
        %v1991 = vrsqrt.pop %v1989
        %v1992 = vrsqrt.pop %v1990
        %v1993 = vmul.f32 %v1977, %v1991
        %v1994 = vmul.f32 %v1978, %v1992
        %v1996 = vlaneseq
        %v1997 = vshrl.u32 %v1996, 7
        %v1998 = vsub.s32 0, %v1997
        %v1999 = vrot.slane %v1966, %v1998
        %v2001 = vmul.f32 %v1993, %v1999
        %v2002 = vmul.f32 %v1994, %v1999
        %v2004 = vlaneseq
        %v2005 = vshrl.u32 %v2004, 7
        %v2006 = vsub.s32 0, %v2005
        %v2007 = vrot.slane %v1967, %v2006
        %v2009 = vadd.f32 %v2001, %v2007
        %v2010 = vadd.f32 %v2002, %v2007
        %v2011 = vpack.c.bf16 %v2010, %v2009
        %v2012 = vld [vmem:[%s735] sm:$0xf]
        %v2013 = vld [vmem:[%s735 + $0x4] sm:$0xf]
        %v2014 = vld [vmem:[%s735 + $0x8] sm:$0xf]
        %v2015 = vld [vmem:[%s735 + $0xc] sm:$0xf]
        %v2016 = vld [vmem:[%s743] sm:$0x1]
        %v2018 = vlaneseq
        %v2019 = vshrl.u32 %v2018, 7
        %v2020 = vsub.s32 0, %v2019
        %v2021 = vrot.slane %v2016, %v2020
        %v2027 = vunpack.c.l.b16 %v2012
        %v2028 = vunpack.c.l.b16 %v2013
        %v2029 = vunpack.c.l.b16 %v2014
        %v2030 = vunpack.c.l.b16 %v2015
        %v2031 = vpack.c.b16 %v2028, %v2027
        %v2032 = vpack.c.b16 %v2030, %v2029
        %v2036 = vsel %vm905, %v2011, 0
        %2038 = vmatprep.subr.bf16.mxu0 0
        %2039 = vmatpush1.bf16.msra.mxu0 %v2031
        %2040 = vmatprep.subr.bf16.mxu0 0
        %2041 = vmatpush1.bf16.msra.mxu0 %v2032
        %2042 = vmatprep.subr.bf16.mxu0 0
        %2043 = vmatpush1.bf16.msra.mxu0 0
        %2044 = vmatprep.subr.bf16.mxu0 0
        %2045 = vmatpush1.bf16.msra.mxu0 0
        %2046 = vmatprep.subr.bf16.mxu0 0
        %2047 = vmatpush1.bf16.msra.mxu0 0
        %2048 = vmatprep.subr.bf16.mxu0 0
        %2049 = vmatpush1.bf16.msra.mxu0 0
        %2050 = vmatprep.subr.bf16.mxu0 0
        %2051 = vmatpush1.bf16.msra.mxu0 0
        %2052 = vmatprep.subr.bf16.mxu0 0
        %2053 = vmatpush1.bf16.msra.mxu0 0
        %2054 = vmatprep.subr.bf16.mxu0 0
        %2055 = vmatpush1.bf16.msra.mxu0 0
        %2056 = vmatprep.subr.bf16.mxu0 0
        %2057 = vmatpush1.bf16.msra.mxu0 0
        %2058 = vmatprep.subr.bf16.mxu0 0
        %2059 = vmatpush1.bf16.msra.mxu0 0
        %2060 = vmatprep.subr.bf16.mxu0 0
        %2061 = vmatpush1.bf16.msra.mxu0 0
        %2062 = vmatprep.subr.bf16.mxu0 0
        %2063 = vmatpush1.bf16.msra.mxu0 0
        %2064 = vmatprep.subr.bf16.mxu0 0
        %2065 = vmatpush1.bf16.msra.mxu0 0
        %2066 = vmatprep.subr.bf16.mxu0 0
        %2067 = vmatpush1.bf16.msra.mxu0 0
        %2068 = vmatprep.subr.bf16.mxu0 0
        %2069 = vmatpush1.bf16.msra.mxu0 0
        %2070 = vmatprep.mubr.bf16.mxu0 0
        %2071 = vmatmul.mubr.bf16.gmra.mrb[0].mxu0 %v2036
        %v2072 = vpop.f32.mrb[0].mxu0
        %v2073 = vadd.f32 %v2021, %v2072
        %v2074 = vpop.f32.mrb[0].mxu0
        %v2075 = vpop.f32.mrb[0].mxu0
        %v2076 = vadd.f32 %v2021, %v2075
        %v2077 = vpop.f32.mrb[0].mxu0
        %2078 = vdwg.mxu0
        %v2079 = vmul.f32 %v2073, 0.5
        %v2080 = vmul.f32 %v2076, 0.5
        %v2081 = vmul.f32 %v2073, 0.70710677
        %v2082 = vmul.f32 %v2076, 0.70710677
        %v2083 = vand.u32 2147483647, %v2081
        %v2084 = vand.u32 2147483647, %v2082
        %v2085 = vmul.f32 %v2083, 0.3275911
        %v2086 = vmul.f32 %v2084, 0.3275911
        %v2087 = vadd.f32 %v2085, 1.0
        %v2088 = vadd.f32 %v2086, 1.0
        %v2089 = vrcp.pop %v2087
        %v2090 = vrcp.pop %v2088
        %v2091 = vmul.f32 %v2087, %v2089
        %v2092 = vmul.f32 %v2088, %v2090
        %v2093 = vsub.f32 2.0, %v2091
        %v2094 = vsub.f32 2.0, %v2092
        %v2095 = vmul.f32 %v2089, %v2093
        %v2096 = vmul.f32 %v2090, %v2094
        %v2097 = vmul.f32 %v2095, 1.0614054
        %v2098 = vmul.f32 %v2096, 1.0614054
        %v2099 = vadd.f32 %v2097, -1.4531521
        %v2100 = vadd.f32 %v2098, -1.4531521
        %v2101 = vmul.f32 %v2099, %v2095
        %v2102 = vmul.f32 %v2100, %v2096
        %v2103 = vadd.f32 %v2101, 1.4214138
        %v2104 = vadd.f32 %v2102, 1.4214138
        %v2105 = vmul.f32 %v2103, %v2095
        %v2106 = vmul.f32 %v2104, %v2096
        %v2107 = vadd.f32 %v2105, -0.28449672
        %v2108 = vadd.f32 %v2106, -0.28449672
        %v2109 = vmul.f32 %v2107, %v2095
        %v2110 = vmul.f32 %v2108, %v2096
        %v2111 = vadd.f32 %v2109, 0.2548296
        %v2112 = vadd.f32 %v2110, 0.2548296
        %v2113 = vmul.f32 %v2111, %v2095
        %v2114 = vmul.f32 %v2112, %v2096
        %v2115 = vsub.f32 0.0, %v2083
        %v2116 = vsub.f32 0.0, %v2084
        %v2117 = vmul.f32 %v2115, %v2083
        %v2118 = vmul.f32 %v2116, %v2084
        %v2119 = vmul.f32 %v2117, 1.442695
        %v2120 = vpow.pop %v2119
        %v2121 = vmul.f32 %v2118, 1.442695
        %v2122 = vpow.pop %v2121
        %v2123 = vmul.f32 %v2113, %v2120
        %v2124 = vmul.f32 %v2114, %v2122
        %v2125 = vsub.f32 1.0, %v2123
        %v2126 = vsub.f32 1.0, %v2124
        %vm2127 = vcmp.ge.f32.partialorder %v2081, 0.0
        %vm2128 = vcmp.ge.f32.partialorder %v2082, 0.0
        %v2129 = vsub.f32 0.0, %v2125
        %v2130 = vsub.f32 0.0, %v2126
        %v2131 = vsel %vm2127, %v2125, %v2129
        %v2132 = vsel %vm2128, %v2126, %v2130
        %v2133 = vadd.f32 %v2131, 1.0
        %v2134 = vadd.f32 %v2132, 1.0
        %v2135 = vmul.f32 %v2079, %v2133
        %v2136 = vmul.f32 %v2080, %v2134
        %v2137 = vpack.c.bf16 %v2136, %v2135
        %v2138 = vld [vmem:[%s752] sm:$0xf]
        %v2139 = vld [vmem:[%s752 + $0x4] sm:$0xf]
        %v2140 = vld [vmem:[%s752 + $0x8] sm:$0xf]
        %v2141 = vld [vmem:[%s752 + $0xc] sm:$0xf]
        %v2142 = vld [vmem:[%s752 + $0x10] sm:$0xf]
        %v2143 = vld [vmem:[%s752 + $0x14] sm:$0xf]
        %v2144 = vld [vmem:[%s752 + $0x18] sm:$0xf]
        %v2145 = vld [vmem:[%s752 + $0x1c] sm:$0xf]
        %v2146 = vld [vmem:[%s760] sm:$0x1]
        %v2148 = vlaneseq
        %v2149 = vshrl.u32 %v2148, 7
        %v2150 = vsub.s32 0, %v2149
        %v2151 = vrot.slane %v2146, %v2150
        %v2161 = vunpack.c.l.b16 %v2138
        %v2162 = vunpack.c.l.b16 %v2139
        %v2163 = vunpack.c.l.b16 %v2140
        %v2164 = vunpack.c.l.b16 %v2141
        %v2165 = vunpack.c.l.b16 %v2142
        %v2166 = vunpack.c.l.b16 %v2143
        %v2167 = vunpack.c.l.b16 %v2144
        %v2168 = vunpack.c.l.b16 %v2145
        %v2169 = vpack.c.b16 %v2162, %v2161
        %v2170 = vpack.c.b16 %v2164, %v2163
        %v2171 = vpack.c.b16 %v2166, %v2165
        %v2172 = vpack.c.b16 %v2168, %v2167
        %vm2177 = vcmask 523264
        %v2179 = vsel %vm2177, %v2137, 0
        %2181 = vmatprep.subr.bf16.mxu0 0
        %2182 = vmatpush1.bf16.msra.mxu0 %v2169
        %2183 = vmatprep.subr.bf16.mxu0 0
        %2184 = vmatpush1.bf16.msra.mxu0 %v2170
        %2185 = vmatprep.subr.bf16.mxu0 0
        %2186 = vmatpush1.bf16.msra.mxu0 %v2171
        %2187 = vmatprep.subr.bf16.mxu0 0
        %2188 = vmatpush1.bf16.msra.mxu0 %v2172
        %2189 = vmatprep.subr.bf16.mxu0 0
        %2190 = vmatpush1.bf16.msra.mxu0 0
        %2191 = vmatprep.subr.bf16.mxu0 0
        %2192 = vmatpush1.bf16.msra.mxu0 0
        %2193 = vmatprep.subr.bf16.mxu0 0
        %2194 = vmatpush1.bf16.msra.mxu0 0
        %2195 = vmatprep.subr.bf16.mxu0 0
        %2196 = vmatpush1.bf16.msra.mxu0 0
        %2197 = vmatprep.subr.bf16.mxu0 0
        %2198 = vmatpush1.bf16.msra.mxu0 0
        %2199 = vmatprep.subr.bf16.mxu0 0
        %2200 = vmatpush1.bf16.msra.mxu0 0
        %2201 = vmatprep.subr.bf16.mxu0 0
        %2202 = vmatpush1.bf16.msra.mxu0 0
        %2203 = vmatprep.subr.bf16.mxu0 0
        %2204 = vmatpush1.bf16.msra.mxu0 0
        %2205 = vmatprep.subr.bf16.mxu0 0
        %2206 = vmatpush1.bf16.msra.mxu0 0
        %2207 = vmatprep.subr.bf16.mxu0 0
        %2208 = vmatpush1.bf16.msra.mxu0 0
        %2209 = vmatprep.subr.bf16.mxu0 0
        %2210 = vmatpush1.bf16.msra.mxu0 0
        %2211 = vmatprep.subr.bf16.mxu0 0
        %2212 = vmatpush1.bf16.msra.mxu0 0
        %2213 = vmatprep.mubr.bf16.mxu0 0
        %2214 = vmatmul.mubr.bf16.gmra.mrb[0].mxu0 %v2179
        %v2215 = vpop.f32.mrb[0].mxu0
        %v2216 = vadd.f32 %v2151, %v2215
        %v2217 = vpop.f32.mrb[0].mxu0
        %v2218 = vpop.f32.mrb[0].mxu0
        %v2219 = vadd.f32 %v2151, %v2218
        %v2220 = vpop.f32.mrb[0].mxu0
        %2221 = vdwg.mxu0
        %v2222 = vadd.f32 %v2009, %v2216
        %v2223 = vadd.f32 %v2010, %v2219
        %v2224 = vld [vmem:[%s768] sm:$0x1]
        %v2225 = vld [vmem:[%s776] sm:$0x1]
        %v2226 = vsel %vm905, %v2222, 0.0
        %2227 = vadd.xlane.f32.xlu0 %v2226
        %v2228 = vpop.xlane.xlu0 %2227
        %v2229 = vsel %vm905, %v2223, 0.0
        %2230 = vadd.xlane.f32.xlu0 %v2229
        %v2231 = vpop.xlane.xlu0 %2230
        %v2232 = vmul.f32 %v2228, %v1974
        %v2233 = vmul.f32 %v2231, %v1974
        %v2234 = vsub.f32 %v2222, %v2232
        %v2235 = vsub.f32 %v2223, %v2233
        %v2236 = vmul.f32 %v2234, %v2234
        %v2237 = vmul.f32 %v2235, %v2235
        %v2238 = vsel %vm905, %v2236, 0.0
        %2239 = vadd.xlane.f32.xlu0 %v2238
        %v2240 = vpop.xlane.xlu0 %2239
        %v2241 = vsel %vm905, %v2237, 0.0
        %2242 = vadd.xlane.f32.xlu0 %v2241
        %v2243 = vpop.xlane.xlu0 %2242
        %v2244 = vmul.f32 %v2240, %v1974
        %v2245 = vmul.f32 %v2243, %v1974
        %v2246 = vadd.f32 %v2244, 1e-05
        %v2247 = vadd.f32 %v2245, 1e-05
        %v2248 = vrsqrt.pop %v2246
        %v2249 = vrsqrt.pop %v2247
        %v2250 = vmul.f32 %v2234, %v2248
        %v2251 = vmul.f32 %v2235, %v2249
        %v2253 = vlaneseq
        %v2254 = vshrl.u32 %v2253, 7
        %v2255 = vsub.s32 0, %v2254
        %v2256 = vrot.slane %v2224, %v2255
        %v2258 = vmul.f32 %v2250, %v2256
        %v2259 = vmul.f32 %v2251, %v2256
        %v2261 = vlaneseq
        %v2262 = vshrl.u32 %v2261, 7
        %v2263 = vsub.s32 0, %v2262
        %v2264 = vrot.slane %v2225, %v2263
        %v2266 = vadd.f32 %v2258, %v2264
        %v2267 = vadd.f32 %v2259, %v2264
        %v2268 = vpack.c.bf16 %v2267, %v2266
        %v2270 = vunpack.c.l.b16 %v2268
        %v2271 = vunpack.c.h.b16 %v2268
        %v2272 = vpack.c.b16 %v2270, %v2270
        %v2273 = vpack.c.b16 %v2271, %v2271
        %vm2276 = vcmask 257024
        %2277 = vst.msk [vmem:[#allocation23] sm:$0xf] %vm2276, %v2272
        %2278 = vst.msk [vmem:[#allocation23 + $0x4] sm:$0xf] %vm2276, %v2273
        // Predicated region
        $region129: #{tpu_custom_call.1} parent=71 // pred_check
          %p2279 = pneg %p412
        $region130: #{tpu_custom_call.1} parent=71 // pred_check_branch
          %2281 = sbr.rel (%p2279) target = $region132
        $region131: #{tpu_custom_call.1} parent=71 // pred_region
          %s2282 = smul.u32 2, %s48
          %s2284 = ssub.s32 128, 128
          %2285 = vsyncadd [#allocation4], %s2284
          %s2286 = smul.addr %s2282, 64
          %s2287 = scalar_lea.hbm %s13, %s2286
          %s2288 = sshll.u32 [#allocation23], 4
          %s2289 = int_to_ptr.vmem [resolvable:$true] %s2288
          %2294 = dma.vmem_to_hbm [thread:$0]  %s2289, 128, %s2287, [#allocation4], 64, 64, 4
        $region132: #{tpu_custom_call.1} parent=71 // pred_fallthru
          _
        // Predicated region
        $region133: #{tpu_custom_call.1} parent=71 // pred_check
          %p2295 = pneg %p412
        $region134: #{tpu_custom_call.1} parent=71 // pred_check_branch
          %2297 = sbr.rel (%p2295) target = $region136
        $region135: #{tpu_custom_call.1} parent=71 // pred_region
          %2298 = dma.done [#allocation4], 128
        $region136: #{tpu_custom_call.1} parent=71 // pred_fallthru
          _
      $region72: #{tpu_custom_call.1} parent=5 // pred_fallthru
        _
      %p2299 = scmp.le.s32.totalorder 2, %s39
      // Predicated region
      $region137: #{tpu_custom_call.1} parent=5 // pred_check
        %p2300 = pneg %p2299
      $region138: #{tpu_custom_call.1} parent=5 // pred_check_branch
        %2302 = sbr.rel (%p2300) target = $region140
      $region139: #{tpu_custom_call.1} parent=5 // pred_region
        %s2303 = ssub.s32 %s39, 2
      $region140: #{tpu_custom_call.1} parent=5 // pred_fallthru
        _
    $region6: #{tpu_custom_call.1} parent=1 // loop_footer
      %s43 = sadd.s32 1, %s39
    $region7: #{tpu_custom_call.1} parent=1 // loop_footer_branch
      %38 = sbr.rel target = $region3
    $region8: #{tpu_custom_call.1} parent=1 // loop_exit
      _
    %2304 = vsyncpa [#allocation3], 1
    %s2305 = scalar_lea.sflag [#allocation3], 1
    %2306 = vsyncpa %s2305, 1
    %2307 = vsyncpa [#allocation6], 1
    %s2308 = scalar_lea.sflag [#allocation6], 1
    %2309 = vsyncpa %s2308, 1
    %2310 = vsyncpa [#allocation9], 1
    %s2311 = scalar_lea.sflag [#allocation9], 1
    %2312 = vsyncpa %s2311, 1
    %2313 = vsyncpa [#allocation12], 1
    %s2314 = scalar_lea.sflag [#allocation12], 1
    %2315 = vsyncpa %s2314, 1
    %2316 = vsyncpa [#allocation15], 1
    %s2317 = scalar_lea.sflag [#allocation15], 1
    %2318 = vsyncpa %s2317, 1
    %2319 = vsyncpa [#allocation18], 1
    %s2320 = scalar_lea.sflag [#allocation18], 1
    %2321 = vsyncpa %s2320, 1
    %2322 = vsyncpa [#allocation21], 1
    %s2323 = scalar_lea.sflag [#allocation21], 1
    %2324 = vsyncpa %s2323, 1
    %2325 = vsyncpa [#allocation4], 1
    %s2326 = scalar_lea.sflag [#allocation4], 1
    %2327 = vsyncpa %s2326, 1

</llo_original>
